<compile_context>
chip_gen: v6e
topology: v6e:2x2x1
jax: 0.10.0
libtpu: 0.0.40
codegen_flags: <defaults>
</compile_context>

<pallas_src>
import jax
import jax.numpy as jnp
from jax import lax
from jax.experimental import pallas as pl
from jax.experimental.pallas import tpu as pltpu

EMBEDDING_DIM = 32
N_HIDDEN = 32
NUM_TAGS = 14          # hidden4 output / CRF size hard-coded to 14 in the module
PAD = 128              # lane-dense padded width of the MLP head
NEG_INF = -1e30


def _tile_m(M):
    # Whole-M block for small problems, 512-row tiles (multiple of 8) otherwise.
    return M if M <= 512 else 512


# ----------------------------------------------------------------------------
# Fused linear kernel: out = x @ w + b   (bf16 matmul inputs, f32 accumulate)
# Used for the per-layer LSTM input projection (both directions fused, N=8H).
# ----------------------------------------------------------------------------
def _linear_kernel(x_ref, w_ref, b_ref, o_ref):
    o_ref[...] = (
        jnp.dot(x_ref[...].astype(jnp.bfloat16), w_ref[...],
                preferred_element_type=jnp.float32)
        + b_ref[...]
    )


def pallas_linear(x, w, b):
    """x: (M, K) f32, w: (K, N) bf16, b: (1, N) f32 -> (M, N) f32."""
    M, K = x.shape
    N = w.shape[1]
    tm = _tile_m(M)
    return pl.pallas_call(
        _linear_kernel,
        out_shape=jax.ShapeDtypeStruct((M, N), jnp.float32),
        grid=(pl.cdiv(M, tm),),
        in_specs=[
            pl.BlockSpec((tm, K), lambda i: (i, 0)),
            pl.BlockSpec((K, N), lambda i: (0, 0)),
            pl.BlockSpec((1, N), lambda i: (0, 0)),
        ],
        out_specs=pl.BlockSpec((tm, N), lambda i: (i, 0)),
        compiler_params=pltpu.CompilerParams(dimension_semantics=("parallel",)),
    )(x, w, b)


# ----------------------------------------------------------------------------
# LSTM recurrence kernel: one grid step per timestep, both directions at once.
# gx blocks stream in (forward at t, backward at T-1-t); W_hh stays resident;
# h/c state lives in VMEM scratch across grid steps.
# ----------------------------------------------------------------------------
def _lstm_recurrence_kernel(gxf_ref, gxb_ref, whf_ref, whb_ref,
                            of_ref, ob_ref, hf, cf, hb, cb):
    B = gxf_ref.shape[1]
    H = gxf_ref.shape[2] // 4
    t = pl.program_id(0)

    @pl.when(t == 0)
    def _():
        hf[...] = jnp.zeros_like(hf)
        cf[...] = jnp.zeros_like(cf)
        hb[...] = jnp.zeros_like(hb)
        cb[...] = jnp.zeros_like(cb)

    # Gate order (PyTorch): [ i | f | g | o ] along the 4H = 128 lanes.
    lane = lax.broadcasted_iota(jnp.int32, (B, 4 * H), 1)
    g_mask = (lane >= 2 * H) & (lane < 3 * H)
    # scale = 2 on the 'g' lanes, 1 elsewhere; then
    #   act = scale * sigmoid(scale * gates) - (scale - 1)
    # gives sigmoid on i/f/o lanes and tanh (= 2*sigmoid(2x)-1) on g lanes with
    # a single EUP transcendental pass over the full 128-lane vreg.
    scale = jnp.where(g_mask, 2.0, 1.0).astype(jnp.float32)

    def cell(gx_ref, w_ref, h_ref, c_ref, o_ref):
        # h_ref/c_ref are (B, 4H); only lanes [0:H] hold real state, the rest is
        # bounded junk that is killed by the zero-padded rows of w_ref.
        gates = gx_ref[0, :, :] + jnp.dot(h_ref[...], w_ref[...],
                                          preferred_element_type=jnp.float32)
        s = jax.nn.sigmoid(gates * scale)
        act = s * scale - (scale - 1.0)
        # act = [ sig(i) | sig(f) | tanh(g) | sig(o) ]; realign via lane rolls
        # (XLU slot, off the VALU/EUP critical path) so the cell update stays
        # on full 128-lane vregs — no 32-lane gate splits.
        tg0 = pltpu.roll(act, 2 * H, 1)   # lanes[0:H] = tanh(g)
        sf0 = pltpu.roll(act, 3 * H, 1)   # lanes[0:H] = sig(f)
        so0 = pltpu.roll(act, 1 * H, 1)   # lanes[0:H] = sig(o)
        c_new = act * tg0 + sf0 * c_ref[...]
        h_new = so0 * jnp.tanh(c_new)
        c_ref[...] = c_new
        h_ref[...] = h_new
        o_ref[0, :, :] = h_new[:, :H]

    cell(gxf_ref, whf_ref, hf, cf, of_ref)
    cell(gxb_ref, whb_ref, hb, cb, ob_ref)


def lstm_recurrence(gx, w_hh_f_pad, w_hh_b_pad):
    """gx: (T, B, 8H) f32 pre-projected gates (fwd lanes [0:4H], bwd [4H:8H]).

    Returns (h_fwd, h_bwd), each (T, B, H) f32.
    """
    T, B, G8 = gx.shape
    H = G8 // 8
    G4 = 4 * H
    return pl.pallas_call(
        _lstm_recurrence_kernel,
        out_shape=(jax.ShapeDtypeStruct((T, B, H), jnp.float32),
                   jax.ShapeDtypeStruct((T, B, H), jnp.float32)),
        grid=(T,),
        in_specs=[
            pl.BlockSpec((1, B, G4), lambda t: (t, 0, 0)),           # fwd gates
            pl.BlockSpec((1, B, G4), lambda t: (T - 1 - t, 0, 1)),   # bwd gates
            pl.BlockSpec((G4, G4), lambda t: (0, 0)),                # W_hh fwd (resident)
            pl.BlockSpec((G4, G4), lambda t: (0, 0)),                # W_hh bwd (resident)
        ],
        out_specs=(
            pl.BlockSpec((1, B, H), lambda t: (t, 0, 0)),
            pl.BlockSpec((1, B, H), lambda t: (T - 1 - t, 0, 0)),
        ),
        scratch_shapes=[
            pltpu.VMEM((B, G4), jnp.float32),   # h fwd
            pltpu.VMEM((B, G4), jnp.float32),   # c fwd
            pltpu.VMEM((B, G4), jnp.float32),   # h bwd
            pltpu.VMEM((B, G4), jnp.float32),   # c bwd
        ],
        compiler_params=pltpu.CompilerParams(dimension_semantics=("arbitrary",)),
    )(gx, gx, w_hh_f_pad, w_hh_b_pad)


# ----------------------------------------------------------------------------
# MLP head: hidden1..hidden4 (all padded to 128 lanes) + log_softmax, fused.
# ----------------------------------------------------------------------------
def _mlp_head_kernel(x_ref, w1, b1, w2, b2, w3, b3, w4, b4, o_ref):
    # TODO(synk): nn.Dropout(0.2/0.3) between layers is identity (inference).
    h = jnp.dot(x_ref[...].astype(jnp.bfloat16), w1[...],
                preferred_element_type=jnp.float32) + b1[...]
    h = jnp.maximum(h, 0.0)
    h = jnp.dot(h.astype(jnp.bfloat16), w2[...],
                preferred_element_type=jnp.float32) + b2[...]
    h = jnp.maximum(h, 0.0)
    h = jnp.dot(h.astype(jnp.bfloat16), w3[...],
                preferred_element_type=jnp.float32) + b3[...]
    h = jnp.maximum(h, 0.0)
    # Padded tag columns get bias NEG_INF -> they vanish from the softmax sum.
    logits = jnp.dot(h.astype(jnp.bfloat16), w4[...],
                     preferred_element_type=jnp.float32) + b4[...]
    m = jnp.max(logits, axis=-1, keepdims=True)
    z = logits - m
    lse = jnp.log(jnp.sum(jnp.exp(z), axis=-1, keepdims=True))
    o_ref[...] = z - lse


def pallas_mlp_head(x, mlp):
    """x: (M, 2H) f32 -> (M, PAD) f32 log-probs (real tags in cols [0:NUM_TAGS])."""
    M, D = x.shape
    (w1, b1), (w2, b2), (w3, b3), (w4, b4) = mlp
    tm = _tile_m(M)

    def resident(shape):
        return pl.BlockSpec(shape, lambda i: (0,) * len(shape))

    return pl.pallas_call(
        _mlp_head_kernel,
        out_shape=jax.ShapeDtypeStruct((M, PAD), jnp.float32),
        grid=(pl.cdiv(M, tm),),
        in_specs=[
            pl.BlockSpec((tm, D), lambda i: (i, 0)),
            resident((D, PAD)), resident((1, PAD)),
            resident((PAD, PAD)), resident((1, PAD)),
            resident((PAD, PAD)), resident((1, PAD)),
            resident((PAD, PAD)), resident((1, PAD)),
        ],
        out_specs=pl.BlockSpec((tm, PAD), lambda i: (i, 0)),
        compiler_params=pltpu.CompilerParams(dimension_semantics=("parallel",)),
    )(x, w1, b1, w2, b2, w3, b3, w4, b4)


# ----------------------------------------------------------------------------
# CRF Viterbi decode (torchcrf semantics, mask = all ones).  14x14 transition
# table — tiny, sequential; kept in JAX lax.scan.
# TODO(synk): could be fused into the Pallas pipeline for long sequences.
# ----------------------------------------------------------------------------
def viterbi_decode(emissions_tm, start_trans, end_trans, trans):
    # emissions_tm: (T, B, K) time-major log-probabilities
    score0 = start_trans[None, :] + emissions_tm[0]            # (B, K)

    def fwd_step(score, em_t):
        next_score = score[:, :, None] + trans[None, :, :] + em_t[:, None, :]
        idx = jnp.argmax(next_score, axis=1)                   # (B, K) best prev tag
        new_score = jnp.max(next_score, axis=1)                # (B, K)
        return new_score, idx

    score, history = lax.scan(fwd_step, score0, emissions_tm[1:])
    score = score + end_trans[None, :]
    last_tag = jnp.argmax(score, axis=1).astype(jnp.int32)     # (B,)

    def back_step(tag, hist_t):
        prev = jnp.take_along_axis(hist_t, tag[:, None], axis=1)[:, 0].astype(jnp.int32)
        return prev, prev

    _, tags_rev = lax.scan(back_step, last_tag, history[::-1])
    tags = jnp.concatenate([tags_rev[::-1], last_tag[None, :]], axis=0)   # (T, B)
    return tags.T                                              # (B, T) int32


# ----------------------------------------------------------------------------
# Parameter init (deterministic, PyTorch-like uniform ranges) with all layout
# pre-processing done once: transposed/fused LSTM projections, padded W_hh,
# 128-padded MLP weights, bf16 matmul weights.
# ----------------------------------------------------------------------------
def _uniform(key, shape, bound):
    return jax.random.uniform(key, shape, jnp.float32, -bound, bound)


def init_params(key, embedding_dim, n_hidden):
    keys = iter(jax.random.split(key, 64))
    H = n_hidden
    k_lstm = 1.0 / (H ** 0.5)

    lstm = []
    in_dim = embedding_dim
    for _ in range(2):                       # num_layers = 2
        w_in_parts, b_parts, whh_pads = [], [], []
        for _ in range(2):                   # directions: forward, backward
            w_ih = _uniform(next(keys), (4 * H, in_dim), k_lstm)
            w_hh = _uniform(next(keys), (4 * H, H), k_lstm)
            b_ih = _uniform(next(keys), (4 * H,), k_lstm)
            b_hh = _uniform(next(keys), (4 * H,), k_lstm)
            w_in_parts.append(w_ih.T)                          # (I, 4H)
            b_parts.append(b_ih + b_hh)                        # pre-added biases
            # (H, 4H) -> zero-pad rows to (4H, 4H) so junk lanes of the VMEM
            # h-state contribute exactly zero in the recurrence matmul.
            whh_pads.append(jnp.pad(w_hh.T, ((0, 3 * H), (0, 0))))
        lstm.append({
            "w_in": jnp.concatenate(w_in_parts, axis=1).astype(jnp.bfloat16),  # (I, 8H)
            "b_in": jnp.concatenate(b_parts).reshape(1, 8 * H),                # (1, 8H) f32
            "w_hh_f": whh_pads[0],                                             # (4H, 4H) f32
            "w_hh_b": whh_pads[1],
        })
        in_dim = 2 * H

    def linear_padded(kw, kb, fan_in, fan_out, pad_in, pad_out, pad_bias=0.0):
        bound = 1.0 / (fan_in ** 0.5)
        w = _uniform(kw, (fan_in, fan_out), bound)
        b = _uniform(kb, (fan_out,), bound)
        w = jnp.pad(w, ((0, pad_in - fan_in), (0, pad_out - fan_out)))
        b = jnp.pad(b, (0, pad_out - fan_out), constant_values=pad_bias)
        return w.astype(jnp.bfloat16), b.reshape(1, pad_out).astype(jnp.float32)

    D = 2 * H
    mlp = (
        linear_padded(next(keys), next(keys), D, 100, D, PAD),
        linear_padded(next(keys), next(keys), 100, 80, PAD, PAD),
        linear_padded(next(keys), next(keys), 80, 50, PAD, PAD),
        # Padded tag columns get bias NEG_INF so log_softmax/Viterbi ignore them.
        linear_padded(next(keys), next(keys), 50, NUM_TAGS, PAD, PAD, pad_bias=NEG_INF),
    )

    crf = {
        "start": _uniform(next(keys), (NUM_TAGS,), 0.1),
        "end": _uniform(next(keys), (NUM_TAGS,), 0.1),
        "trans": _uniform(next(keys), (NUM_TAGS, NUM_TAGS), 0.1),
    }
    return {"lstm": lstm, "mlp": mlp, "crf": crf}


# ----------------------------------------------------------------------------
# Full forward pass
# ----------------------------------------------------------------------------
@jax.jit
def ner_classifier_crf_forward(sentence, params):
    # time-major layout for the whole pipeline
    x = jnp.transpose(sentence.astype(jnp.float32), (1, 0, 2))   # (T, B, E)
    T, B, _ = x.shape

    for layer_p in params["lstm"]:
        I = x.shape[-1]
        # One fused (fwd+bwd) input projection per layer: (T*B, I) @ (I, 8H).
        gx = pallas_linear(x.reshape(T * B, I), layer_p["w_in"], layer_p["b_in"])
        gx = gx.reshape(T, B, 8 * N_HIDDEN)
        h_fwd, h_bwd = lstm_recurrence(gx, layer_p["w_hh_f"], layer_p["w_hh_b"])
        x = jnp.concatenate([h_fwd, h_bwd], axis=-1)              # (T, B, 2H)
        # TODO(synk): inter-layer LSTM dropout (p=0.3) omitted — inference semantics.

    D = x.shape[-1]
    logp_pad = pallas_mlp_head(x.reshape(T * B, D), params["mlp"])  # (T*B, 128)
    log_probs = logp_pad[:, :NUM_TAGS].reshape(T, B, NUM_TAGS)      # drop padded tags
    tags = viterbi_decode(log_probs, params["crf"]["start"],
                          params["crf"]["end"], params["crf"]["trans"])
    return tags                                                     # (B, T) int32


if __name__ == "__main__":
    key = jax.random.PRNGKey(0)
    k_param, k_x = jax.random.split(key)

    B, T = 2, 8
    params = init_params(k_param, EMBEDDING_DIM, N_HIDDEN)
    sentence = jax.random.normal(k_x, (B, T, EMBEDDING_DIM), jnp.float32)

    tags = ner_classifier_crf_forward(sentence, params)
    jax.block_until_ready(tags)
    assert tags.shape == (B, T) and tags.dtype == jnp.int32
    print("KERNEL_OK")
</pallas_src>

<mosaic_0001>
module attributes {stable_mosaic.version = 11 : i64} {
  func.func @_linear_kernel(%arg0: i32, %arg1: memref<16x32xf32, #tpu.memory_space<vmem>>, %arg2: memref<32x256xbf16, #tpu.memory_space<vmem>>, %arg3: memref<1x256xf32, #tpu.memory_space<vmem>>, %arg4: memref<16x256xf32, #tpu.memory_space<vmem>>) attributes {dimension_semantics = [#tpu.dimension_semantics<parallel>], iteration_bounds = array<i64: 1>, scalar_prefetch = 0 : i64, scratch_operands = 0 : i64, tpu.core_type = #tpu.core_type<tc>, window_params = [{transform_indices = @transform_0, window_bounds = array<i64: 16, 32>}, {pipeline_mode = #tpu.pipeline_mode<synchronous>, transform_indices = @transform_1, window_bounds = array<i64: 32, 256>}, {pipeline_mode = #tpu.pipeline_mode<synchronous>, transform_indices = @transform_2, window_bounds = array<i64: 1, 256>}, {transform_indices = @transform_3, window_bounds = array<i64: 16, 256>}]} {
    %c0 = arith.constant 0 : index
    %c0_0 = arith.constant 0 : index
    %0 = vector.load %arg1[%c0, %c0_0] : memref<16x32xf32, #tpu.memory_space<vmem>>, vector<16x32xf32>
    %1 = arith.truncf %0 : vector<16x32xf32> to vector<16x32xbf16>
    %c0_1 = arith.constant 0 : index
    %c0_2 = arith.constant 0 : index
    %2 = vector.load %arg2[%c0_1, %c0_2] : memref<32x256xbf16, #tpu.memory_space<vmem>>, vector<32x256xbf16>
    %cst = arith.constant dense<0.000000e+00> : vector<16x256xf32>
    %3 = tpu.matmul %1, %2, %cst {dimension_numbers = #tpu.dot_dimension_numbers<[1], [0], [0], [1], [0, 0, 1, 1], [], []>} : vector<16x32xbf16>, vector<32x256xbf16>, vector<16x256xf32> -> vector<16x256xf32>
    %c0_3 = arith.constant 0 : index
    %c0_4 = arith.constant 0 : index
    %4 = vector.load %arg3[%c0_3, %c0_4] : memref<1x256xf32, #tpu.memory_space<vmem>>, vector<1x256xf32>
    %5 = vector.broadcast %4 : vector<1x256xf32> to vector<16x256xf32>
    %6 = arith.addf %3, %5 : vector<16x256xf32>
    %c0_5 = arith.constant 0 : index
    %c0_6 = arith.constant 0 : index
    %7 = vector.load %arg4[%c0_5, %c0_6] : memref<16x256xf32, #tpu.memory_space<vmem>>, vector<16x256xf32>
    tpu.vector_store %arg4[%c0_5, %c0_6], %6 {strides = array<i32>} : memref<16x256xf32, #tpu.memory_space<vmem>>, vector<16x256xf32>,
    return
  }
  func.func @transform_0(%arg0: i32) -> (i32, i32) {
    %c0_i32 = arith.constant 0 : i32
    %c0_i32_0 = arith.constant 0 : i32
    return %arg0, %c0_i32 : i32, i32
  }
  func.func @transform_1(%arg0: i32) -> (i32, i32) {
    %c0_i32 = arith.constant 0 : i32
    %c0_i32_0 = arith.constant 0 : i32
    %c0_i32_1 = arith.constant 0 : i32
    return %c0_i32, %c0_i32_0 : i32, i32
  }
  func.func @transform_2(%arg0: i32) -> (i32, i32) {
    %c0_i32 = arith.constant 0 : i32
    %c0_i32_0 = arith.constant 0 : i32
    %c0_i32_1 = arith.constant 0 : i32
    return %c0_i32, %c0_i32_0 : i32, i32
  }
  func.func @transform_3(%arg0: i32) -> (i32, i32) {
    %c0_i32 = arith.constant 0 : i32
    %c0_i32_0 = arith.constant 0 : i32
    return %arg0, %c0_i32 : i32, i32
  }
}

module attributes {stable_mosaic.version = 11 : i64} {
  func.func @_lstm_recurrence_kernel(%arg0: i32, %arg1: memref<1x2x128xf32, #tpu.memory_space<vmem>>, %arg2: memref<1x2x128xf32, #tpu.memory_space<vmem>>, %arg3: memref<128x128xf32, #tpu.memory_space<vmem>>, %arg4: memref<128x128xf32, #tpu.memory_space<vmem>>, %arg5: memref<1x2x32xf32, #tpu.memory_space<vmem>>, %arg6: memref<1x2x32xf32, #tpu.memory_space<vmem>>, %arg7: memref<2x128xf32, #tpu.memory_space<vmem>>, %arg8: memref<2x128xf32, #tpu.memory_space<vmem>>, %arg9: memref<2x128xf32, #tpu.memory_space<vmem>>, %arg10: memref<2x128xf32, #tpu.memory_space<vmem>>) attributes {dimension_semantics = [#tpu.dimension_semantics<arbitrary>], iteration_bounds = array<i64: 8>, scalar_prefetch = 0 : i64, scratch_operands = 4 : i64, tpu.core_type = #tpu.core_type<tc>, window_params = [{transform_indices = @transform_0, window_bounds = array<i64: 1, 2, 128>}, {transform_indices = @transform_1, window_bounds = array<i64: 1, 2, 128>}, {pipeline_mode = #tpu.pipeline_mode<synchronous>, transform_indices = @transform_2, window_bounds = array<i64: 128, 128>}, {pipeline_mode = #tpu.pipeline_mode<synchronous>, transform_indices = @transform_3, window_bounds = array<i64: 128, 128>}, {transform_indices = @transform_4, window_bounds = array<i64: 1, 2, 32>}, {transform_indices = @transform_5, window_bounds = array<i64: 1, 2, 32>}]} {
    %c0_i32 = arith.constant 0 : i32
    %0 = arith.cmpi eq, %arg0, %c0_i32 : i32
    %1 = arith.extui %0 : i1 to i32
    %c0_i32_0 = arith.constant 0 : i32
    %2 = arith.cmpi ne, %1, %c0_i32_0 : i32
    scf.if %2 {
      %cst_44 = arith.constant 0.000000e+00 : f32
      %74 = vector.broadcast %cst_44 : f32 to vector<2x128xf32>
      %c0_45 = arith.constant 0 : index
      %c0_46 = arith.constant 0 : index
      %75 = vector.load %arg7[%c0_45, %c0_46] : memref<2x128xf32, #tpu.memory_space<vmem>>, vector<2x128xf32>
      tpu.vector_store %arg7[%c0_45, %c0_46], %74 {strides = array<i32>} : memref<2x128xf32, #tpu.memory_space<vmem>>, vector<2x128xf32>,
      %cst_47 = arith.constant 0.000000e+00 : f32
      %76 = vector.broadcast %cst_47 : f32 to vector<2x128xf32>
      %c0_48 = arith.constant 0 : index
      %c0_49 = arith.constant 0 : index
      %77 = vector.load %arg8[%c0_48, %c0_49] : memref<2x128xf32, #tpu.memory_space<vmem>>, vector<2x128xf32>
      tpu.vector_store %arg8[%c0_48, %c0_49], %76 {strides = array<i32>} : memref<2x128xf32, #tpu.memory_space<vmem>>, vector<2x128xf32>,
      %cst_50 = arith.constant 0.000000e+00 : f32
      %78 = vector.broadcast %cst_50 : f32 to vector<2x128xf32>
      %c0_51 = arith.constant 0 : index
      %c0_52 = arith.constant 0 : index
      %79 = vector.load %arg9[%c0_51, %c0_52] : memref<2x128xf32, #tpu.memory_space<vmem>>, vector<2x128xf32>
      tpu.vector_store %arg9[%c0_51, %c0_52], %78 {strides = array<i32>} : memref<2x128xf32, #tpu.memory_space<vmem>>, vector<2x128xf32>,
      %cst_53 = arith.constant 0.000000e+00 : f32
      %80 = vector.broadcast %cst_53 : f32 to vector<2x128xf32>
      %c0_54 = arith.constant 0 : index
      %c0_55 = arith.constant 0 : index
      %81 = vector.load %arg10[%c0_54, %c0_55] : memref<2x128xf32, #tpu.memory_space<vmem>>, vector<2x128xf32>
      tpu.vector_store %arg10[%c0_54, %c0_55], %80 {strides = array<i32>} : memref<2x128xf32, #tpu.memory_space<vmem>>, vector<2x128xf32>,
    } else {
    }
    %3 = tpu.iota {dimensions = array<i32: 1>} : vector<2x128xi32>
    %c64_i32 = arith.constant 64 : i32
    %4 = vector.broadcast %c64_i32 : i32 to vector<2x128xi32>
    %5 = arith.cmpi sge, %3, %4 : vector<2x128xi32>
    %c96_i32 = arith.constant 96 : i32
    %6 = vector.broadcast %c96_i32 : i32 to vector<2x128xi32>
    %7 = arith.cmpi slt, %3, %6 : vector<2x128xi32>
    %8 = arith.andi %5, %7 : vector<2x128xi1>
    %cst = arith.constant 2.000000e+00 : f32
    %cst_1 = arith.constant 1.000000e+00 : f32
    %9 = vector.broadcast %cst : f32 to vector<2x128xf32>
    %10 = vector.broadcast %cst_1 : f32 to vector<2x128xf32>
    %11 = arith.select %8, %9, %10 : vector<2x128xi1>, vector<2x128xf32>
    %c0 = arith.constant 0 : index
    %c0_2 = arith.constant 0 : index
    %c0_3 = arith.constant 0 : index
    %12 = vector.load %arg1[%c0, %c0_2, %c0_3] : memref<1x2x128xf32, #tpu.memory_space<vmem>>, vector<1x2x128xf32>
    %13 = vector.shape_cast %12 : vector<1x2x128xf32> to vector<2x128xf32>
    %c0_4 = arith.constant 0 : index
    %c0_5 = arith.constant 0 : index
    %14 = vector.load %arg7[%c0_4, %c0_5] : memref<2x128xf32, #tpu.memory_space<vmem>>, vector<2x128xf32>
    %c0_6 = arith.constant 0 : index
    %c0_7 = arith.constant 0 : index
    %15 = vector.load %arg3[%c0_6, %c0_7] : memref<128x128xf32, #tpu.memory_space<vmem>>, vector<128x128xf32>
    %cst_8 = arith.constant dense<0.000000e+00> : vector<2x128xf32>
    %16 = tpu.matmul %14, %15, %cst_8 {dimension_numbers = #tpu.dot_dimension_numbers<[1], [0], [0], [1], [0, 0, 1, 1], [], []>} : vector<2x128xf32>, vector<128x128xf32>, vector<2x128xf32> -> vector<2x128xf32>
    %17 = arith.addf %13, %16 : vector<2x128xf32>
    %18 = arith.mulf %17, %11 : vector<2x128xf32>
    %19 = arith.negf %18 : vector<2x128xf32>
    %20 = math.exp %19 : vector<2x128xf32>
    %cst_9 = arith.constant 1.000000e+00 : f32
    %21 = vector.broadcast %cst_9 : f32 to vector<2x128xf32>
    %22 = arith.addf %21, %20 : vector<2x128xf32>
    %23 = arith.divf %21, %22 : vector<2x128xf32>
    %24 = arith.mulf %23, %11 : vector<2x128xf32>
    %cst_10 = arith.constant 1.000000e+00 : f32
    %25 = vector.broadcast %cst_10 : f32 to vector<2x128xf32>
    %26 = arith.subf %11, %25 : vector<2x128xf32>
    %27 = arith.subf %24, %26 : vector<2x128xf32>
    %c64_i32_11 = arith.constant 64 : i32
    %28 = tpu.dynamic_rotate %27 by %c64_i32_11 dim 1 : vector<2x128xf32>, i32 -> vector<2x128xf32>
    %c96_i32_12 = arith.constant 96 : i32
    %29 = tpu.dynamic_rotate %27 by %c96_i32_12 dim 1 : vector<2x128xf32>, i32 -> vector<2x128xf32>
    %c32_i32 = arith.constant 32 : i32
    %30 = tpu.dynamic_rotate %27 by %c32_i32 dim 1 : vector<2x128xf32>, i32 -> vector<2x128xf32>
    %31 = arith.mulf %27, %28 : vector<2x128xf32>
    %c0_13 = arith.constant 0 : index
    %c0_14 = arith.constant 0 : index
    %32 = vector.load %arg8[%c0_13, %c0_14] : memref<2x128xf32, #tpu.memory_space<vmem>>, vector<2x128xf32>
    %33 = arith.mulf %29, %32 : vector<2x128xf32>
    %34 = arith.addf %31, %33 : vector<2x128xf32>
    %35 = math.tanh %34 : vector<2x128xf32>
    %36 = arith.mulf %30, %35 : vector<2x128xf32>
    %c0_15 = arith.constant 0 : index
    %c0_16 = arith.constant 0 : index
    %37 = vector.load %arg8[%c0_15, %c0_16] : memref<2x128xf32, #tpu.memory_space<vmem>>, vector<2x128xf32>
    tpu.vector_store %arg8[%c0_15, %c0_16], %34 {strides = array<i32>} : memref<2x128xf32, #tpu.memory_space<vmem>>, vector<2x128xf32>,
    %c0_17 = arith.constant 0 : index
    %c0_18 = arith.constant 0 : index
    %38 = vector.load %arg7[%c0_17, %c0_18] : memref<2x128xf32, #tpu.memory_space<vmem>>, vector<2x128xf32>
    tpu.vector_store %arg7[%c0_17, %c0_18], %36 {strides = array<i32>} : memref<2x128xf32, #tpu.memory_space<vmem>>, vector<2x128xf32>,
    %39 = vector.extract_strided_slice %36 {offsets = [0, 0], sizes = [2, 32], strides = [1, 1]} : vector<2x128xf32> to vector<2x32xf32>
    %c0_19 = arith.constant 0 : index
    %c0_20 = arith.constant 0 : index
    %c0_21 = arith.constant 0 : index
    %40 = vector.load %arg5[%c0_19, %c0_20, %c0_21] : memref<1x2x32xf32, #tpu.memory_space<vmem>>, vector<1x2x32xf32>
    %41 = vector.shape_cast %40 : vector<1x2x32xf32> to vector<2x32xf32>
    %42 = vector.shape_cast %39 : vector<2x32xf32> to vector<1x2x32xf32>
    tpu.vector_store %arg5[%c0_19, %c0_20, %c0_21], %42 {strides = array<i32>} : memref<1x2x32xf32, #tpu.memory_space<vmem>>, vector<1x2x32xf32>,
    %c0_22 = arith.constant 0 : index
    %c0_23 = arith.constant 0 : index
    %c0_24 = arith.constant 0 : index
    %43 = vector.load %arg2[%c0_22, %c0_23, %c0_24] : memref<1x2x128xf32, #tpu.memory_space<vmem>>, vector<1x2x128xf32>
    %44 = vector.shape_cast %43 : vector<1x2x128xf32> to vector<2x128xf32>
    %c0_25 = arith.constant 0 : index
    %c0_26 = arith.constant 0 : index
    %45 = vector.load %arg9[%c0_25, %c0_26] : memref<2x128xf32, #tpu.memory_space<vmem>>, vector<2x128xf32>
    %c0_27 = arith.constant 0 : index
    %c0_28 = arith.constant 0 : index
    %46 = vector.load %arg4[%c0_27, %c0_28] : memref<128x128xf32, #tpu.memory_space<vmem>>, vector<128x128xf32>
    %cst_29 = arith.constant dense<0.000000e+00> : vector<2x128xf32>
    %47 = tpu.matmul %45, %46, %cst_29 {dimension_numbers = #tpu.dot_dimension_numbers<[1], [0], [0], [1], [0, 0, 1, 1], [], []>} : vector<2x128xf32>, vector<128x128xf32>, vector<2x128xf32> -> vector<2x128xf32>
    %48 = arith.addf %44, %47 : vector<2x128xf32>
    %49 = arith.mulf %48, %11 : vector<2x128xf32>
    %50 = arith.negf %49 : vector<2x128xf32>
    %51 = math.exp %50 : vector<2x128xf32>
    %cst_30 = arith.constant 1.000000e+00 : f32
    %52 = vector.broadcast %cst_30 : f32 to vector<2x128xf32>
    %53 = arith.addf %52, %51 : vector<2x128xf32>
    %54 = arith.divf %52, %53 : vector<2x128xf32>
    %55 = arith.mulf %54, %11 : vector<2x128xf32>
    %cst_31 = arith.constant 1.000000e+00 : f32
    %56 = vector.broadcast %cst_31 : f32 to vector<2x128xf32>
    %57 = arith.subf %11, %56 : vector<2x128xf32>
    %58 = arith.subf %55, %57 : vector<2x128xf32>
    %c64_i32_32 = arith.constant 64 : i32
    %59 = tpu.dynamic_rotate %58 by %c64_i32_32 dim 1 : vector<2x128xf32>, i32 -> vector<2x128xf32>
    %c96_i32_33 = arith.constant 96 : i32
    %60 = tpu.dynamic_rotate %58 by %c96_i32_33 dim 1 : vector<2x128xf32>, i32 -> vector<2x128xf32>
    %c32_i32_34 = arith.constant 32 : i32
    %61 = tpu.dynamic_rotate %58 by %c32_i32_34 dim 1 : vector<2x128xf32>, i32 -> vector<2x128xf32>
    %62 = arith.mulf %58, %59 : vector<2x128xf32>
    %c0_35 = arith.constant 0 : index
    %c0_36 = arith.constant 0 : index
    %63 = vector.load %arg10[%c0_35, %c0_36] : memref<2x128xf32, #tpu.memory_space<vmem>>, vector<2x128xf32>
    %64 = arith.mulf %60, %63 : vector<2x128xf32>
    %65 = arith.addf %62, %64 : vector<2x128xf32>
    %66 = math.tanh %65 : vector<2x128xf32>
    %67 = arith.mulf %61, %66 : vector<2x128xf32>
    %c0_37 = arith.constant 0 : index
    %c0_38 = arith.constant 0 : index
    %68 = vector.load %arg10[%c0_37, %c0_38] : memref<2x128xf32, #tpu.memory_space<vmem>>, vector<2x128xf32>
    tpu.vector_store %arg10[%c0_37, %c0_38], %65 {strides = array<i32>} : memref<2x128xf32, #tpu.memory_space<vmem>>, vector<2x128xf32>,
    %c0_39 = arith.constant 0 : index
    %c0_40 = arith.constant 0 : index
    %69 = vector.load %arg9[%c0_39, %c0_40] : memref<2x128xf32, #tpu.memory_space<vmem>>, vector<2x128xf32>
    tpu.vector_store %arg9[%c0_39, %c0_40], %67 {strides = array<i32>} : memref<2x128xf32, #tpu.memory_space<vmem>>, vector<2x128xf32>,
    %70 = vector.extract_strided_slice %67 {offsets = [0, 0], sizes = [2, 32], strides = [1, 1]} : vector<2x128xf32> to vector<2x32xf32>
    %c0_41 = arith.constant 0 : index
    %c0_42 = arith.constant 0 : index
    %c0_43 = arith.constant 0 : index
    %71 = vector.load %arg6[%c0_41, %c0_42, %c0_43] : memref<1x2x32xf32, #tpu.memory_space<vmem>>, vector<1x2x32xf32>
    %72 = vector.shape_cast %71 : vector<1x2x32xf32> to vector<2x32xf32>
    %73 = vector.shape_cast %70 : vector<2x32xf32> to vector<1x2x32xf32>
    tpu.vector_store %arg6[%c0_41, %c0_42, %c0_43], %73 {strides = array<i32>} : memref<1x2x32xf32, #tpu.memory_space<vmem>>, vector<1x2x32xf32>,
    return
  }
  func.func @transform_0(%arg0: i32) -> (i32, i32, i32) {
    %c0_i32 = arith.constant 0 : i32
    %c0_i32_0 = arith.constant 0 : i32
    %c0_i32_1 = arith.constant 0 : i32
    return %arg0, %c0_i32, %c0_i32_0 : i32, i32, i32
  }
  func.func @transform_1(%arg0: i32) -> (i32, i32, i32) {
    %c7_i32 = arith.constant 7 : i32
    %0 = arith.subi %c7_i32, %arg0 : i32
    %c0_i32 = arith.constant 0 : i32
    %c1_i32 = arith.constant 1 : i32
    %c0_i32_0 = arith.constant 0 : i32
    return %0, %c0_i32, %c1_i32 : i32, i32, i32
  }
  func.func @transform_2(%arg0: i32) -> (i32, i32) {
    %c0_i32 = arith.constant 0 : i32
    %c0_i32_0 = arith.constant 0 : i32
    %c0_i32_1 = arith.constant 0 : i32
    return %c0_i32, %c0_i32_0 : i32, i32
  }
  func.func @transform_3(%arg0: i32) -> (i32, i32) {
    %c0_i32 = arith.constant 0 : i32
    %c0_i32_0 = arith.constant 0 : i32
    %c0_i32_1 = arith.constant 0 : i32
    return %c0_i32, %c0_i32_0 : i32, i32
  }
  func.func @transform_4(%arg0: i32) -> (i32, i32, i32) {
    %c0_i32 = arith.constant 0 : i32
    %c0_i32_0 = arith.constant 0 : i32
    %c0_i32_1 = arith.constant 0 : i32
    return %arg0, %c0_i32, %c0_i32_0 : i32, i32, i32
  }
  func.func @transform_5(%arg0: i32) -> (i32, i32, i32) {
    %c7_i32 = arith.constant 7 : i32
    %0 = arith.subi %c7_i32, %arg0 : i32
    %c0_i32 = arith.constant 0 : i32
    %c0_i32_0 = arith.constant 0 : i32
    %c0_i32_1 = arith.constant 0 : i32
    return %0, %c0_i32, %c0_i32_0 : i32, i32, i32
  }
}

module attributes {stable_mosaic.version = 11 : i64} {
  func.func @_linear_kernel(%arg0: i32, %arg1: memref<16x64xf32, #tpu.memory_space<vmem>>, %arg2: memref<64x256xbf16, #tpu.memory_space<vmem>>, %arg3: memref<1x256xf32, #tpu.memory_space<vmem>>, %arg4: memref<16x256xf32, #tpu.memory_space<vmem>>) attributes {dimension_semantics = [#tpu.dimension_semantics<parallel>], iteration_bounds = array<i64: 1>, scalar_prefetch = 0 : i64, scratch_operands = 0 : i64, tpu.core_type = #tpu.core_type<tc>, window_params = [{transform_indices = @transform_0, window_bounds = array<i64: 16, 64>}, {pipeline_mode = #tpu.pipeline_mode<synchronous>, transform_indices = @transform_1, window_bounds = array<i64: 64, 256>}, {pipeline_mode = #tpu.pipeline_mode<synchronous>, transform_indices = @transform_2, window_bounds = array<i64: 1, 256>}, {transform_indices = @transform_3, window_bounds = array<i64: 16, 256>}]} {
    %c0 = arith.constant 0 : index
    %c0_0 = arith.constant 0 : index
    %0 = vector.load %arg1[%c0, %c0_0] : memref<16x64xf32, #tpu.memory_space<vmem>>, vector<16x64xf32>
    %1 = arith.truncf %0 : vector<16x64xf32> to vector<16x64xbf16>
    %c0_1 = arith.constant 0 : index
    %c0_2 = arith.constant 0 : index
    %2 = vector.load %arg2[%c0_1, %c0_2] : memref<64x256xbf16, #tpu.memory_space<vmem>>, vector<64x256xbf16>
    %cst = arith.constant dense<0.000000e+00> : vector<16x256xf32>
    %3 = tpu.matmul %1, %2, %cst {dimension_numbers = #tpu.dot_dimension_numbers<[1], [0], [0], [1], [0, 0, 1, 1], [], []>} : vector<16x64xbf16>, vector<64x256xbf16>, vector<16x256xf32> -> vector<16x256xf32>
    %c0_3 = arith.constant 0 : index
    %c0_4 = arith.constant 0 : index
    %4 = vector.load %arg3[%c0_3, %c0_4] : memref<1x256xf32, #tpu.memory_space<vmem>>, vector<1x256xf32>
    %5 = vector.broadcast %4 : vector<1x256xf32> to vector<16x256xf32>
    %6 = arith.addf %3, %5 : vector<16x256xf32>
    %c0_5 = arith.constant 0 : index
    %c0_6 = arith.constant 0 : index
    %7 = vector.load %arg4[%c0_5, %c0_6] : memref<16x256xf32, #tpu.memory_space<vmem>>, vector<16x256xf32>
    tpu.vector_store %arg4[%c0_5, %c0_6], %6 {strides = array<i32>} : memref<16x256xf32, #tpu.memory_space<vmem>>, vector<16x256xf32>,
    return
  }
  func.func @transform_0(%arg0: i32) -> (i32, i32) {
    %c0_i32 = arith.constant 0 : i32
    %c0_i32_0 = arith.constant 0 : i32
    return %arg0, %c0_i32 : i32, i32
  }
  func.func @transform_1(%arg0: i32) -> (i32, i32) {
    %c0_i32 = arith.constant 0 : i32
    %c0_i32_0 = arith.constant 0 : i32
    %c0_i32_1 = arith.constant 0 : i32
    return %c0_i32, %c0_i32_0 : i32, i32
  }
  func.func @transform_2(%arg0: i32) -> (i32, i32) {
    %c0_i32 = arith.constant 0 : i32
    %c0_i32_0 = arith.constant 0 : i32
    %c0_i32_1 = arith.constant 0 : i32
    return %c0_i32, %c0_i32_0 : i32, i32
  }
  func.func @transform_3(%arg0: i32) -> (i32, i32) {
    %c0_i32 = arith.constant 0 : i32
    %c0_i32_0 = arith.constant 0 : i32
    return %arg0, %c0_i32 : i32, i32
  }
}

module attributes {stable_mosaic.version = 11 : i64} {
  func.func @_lstm_recurrence_kernel(%arg0: i32, %arg1: memref<1x2x128xf32, #tpu.memory_space<vmem>>, %arg2: memref<1x2x128xf32, #tpu.memory_space<vmem>>, %arg3: memref<128x128xf32, #tpu.memory_space<vmem>>, %arg4: memref<128x128xf32, #tpu.memory_space<vmem>>, %arg5: memref<1x2x32xf32, #tpu.memory_space<vmem>>, %arg6: memref<1x2x32xf32, #tpu.memory_space<vmem>>, %arg7: memref<2x128xf32, #tpu.memory_space<vmem>>, %arg8: memref<2x128xf32, #tpu.memory_space<vmem>>, %arg9: memref<2x128xf32, #tpu.memory_space<vmem>>, %arg10: memref<2x128xf32, #tpu.memory_space<vmem>>) attributes {dimension_semantics = [#tpu.dimension_semantics<arbitrary>], iteration_bounds = array<i64: 8>, scalar_prefetch = 0 : i64, scratch_operands = 4 : i64, tpu.core_type = #tpu.core_type<tc>, window_params = [{transform_indices = @transform_0, window_bounds = array<i64: 1, 2, 128>}, {transform_indices = @transform_1, window_bounds = array<i64: 1, 2, 128>}, {pipeline_mode = #tpu.pipeline_mode<synchronous>, transform_indices = @transform_2, window_bounds = array<i64: 128, 128>}, {pipeline_mode = #tpu.pipeline_mode<synchronous>, transform_indices = @transform_3, window_bounds = array<i64: 128, 128>}, {transform_indices = @transform_4, window_bounds = array<i64: 1, 2, 32>}, {transform_indices = @transform_5, window_bounds = array<i64: 1, 2, 32>}]} {
    %c0_i32 = arith.constant 0 : i32
    %0 = arith.cmpi eq, %arg0, %c0_i32 : i32
    %1 = arith.extui %0 : i1 to i32
    %c0_i32_0 = arith.constant 0 : i32
    %2 = arith.cmpi ne, %1, %c0_i32_0 : i32
    scf.if %2 {
      %cst_44 = arith.constant 0.000000e+00 : f32
      %74 = vector.broadcast %cst_44 : f32 to vector<2x128xf32>
      %c0_45 = arith.constant 0 : index
      %c0_46 = arith.constant 0 : index
      %75 = vector.load %arg7[%c0_45, %c0_46] : memref<2x128xf32, #tpu.memory_space<vmem>>, vector<2x128xf32>
      tpu.vector_store %arg7[%c0_45, %c0_46], %74 {strides = array<i32>} : memref<2x128xf32, #tpu.memory_space<vmem>>, vector<2x128xf32>,
      %cst_47 = arith.constant 0.000000e+00 : f32
      %76 = vector.broadcast %cst_47 : f32 to vector<2x128xf32>
      %c0_48 = arith.constant 0 : index
      %c0_49 = arith.constant 0 : index
      %77 = vector.load %arg8[%c0_48, %c0_49] : memref<2x128xf32, #tpu.memory_space<vmem>>, vector<2x128xf32>
      tpu.vector_store %arg8[%c0_48, %c0_49], %76 {strides = array<i32>} : memref<2x128xf32, #tpu.memory_space<vmem>>, vector<2x128xf32>,
      %cst_50 = arith.constant 0.000000e+00 : f32
      %78 = vector.broadcast %cst_50 : f32 to vector<2x128xf32>
      %c0_51 = arith.constant 0 : index
      %c0_52 = arith.constant 0 : index
      %79 = vector.load %arg9[%c0_51, %c0_52] : memref<2x128xf32, #tpu.memory_space<vmem>>, vector<2x128xf32>
      tpu.vector_store %arg9[%c0_51, %c0_52], %78 {strides = array<i32>} : memref<2x128xf32, #tpu.memory_space<vmem>>, vector<2x128xf32>,
      %cst_53 = arith.constant 0.000000e+00 : f32
      %80 = vector.broadcast %cst_53 : f32 to vector<2x128xf32>
      %c0_54 = arith.constant 0 : index
      %c0_55 = arith.constant 0 : index
      %81 = vector.load %arg10[%c0_54, %c0_55] : memref<2x128xf32, #tpu.memory_space<vmem>>, vector<2x128xf32>
      tpu.vector_store %arg10[%c0_54, %c0_55], %80 {strides = array<i32>} : memref<2x128xf32, #tpu.memory_space<vmem>>, vector<2x128xf32>,
    } else {
    }
    %3 = tpu.iota {dimensions = array<i32: 1>} : vector<2x128xi32>
    %c64_i32 = arith.constant 64 : i32
    %4 = vector.broadcast %c64_i32 : i32 to vector<2x128xi32>
    %5 = arith.cmpi sge, %3, %4 : vector<2x128xi32>
    %c96_i32 = arith.constant 96 : i32
    %6 = vector.broadcast %c96_i32 : i32 to vector<2x128xi32>
    %7 = arith.cmpi slt, %3, %6 : vector<2x128xi32>
    %8 = arith.andi %5, %7 : vector<2x128xi1>
    %cst = arith.constant 2.000000e+00 : f32
    %cst_1 = arith.constant 1.000000e+00 : f32
    %9 = vector.broadcast %cst : f32 to vector<2x128xf32>
    %10 = vector.broadcast %cst_1 : f32 to vector<2x128xf32>
    %11 = arith.select %8, %9, %10 : vector<2x128xi1>, vector<2x128xf32>
    %c0 = arith.constant 0 : index
    %c0_2 = arith.constant 0 : index
    %c0_3 = arith.constant 0 : index
    %12 = vector.load %arg1[%c0, %c0_2, %c0_3] : memref<1x2x128xf32, #tpu.memory_space<vmem>>, vector<1x2x128xf32>
    %13 = vector.shape_cast %12 : vector<1x2x128xf32> to vector<2x128xf32>
    %c0_4 = arith.constant 0 : index
    %c0_5 = arith.constant 0 : index
    %14 = vector.load %arg7[%c0_4, %c0_5] : memref<2x128xf32, #tpu.memory_space<vmem>>, vector<2x128xf32>
    %c0_6 = arith.constant 0 : index
    %c0_7 = arith.constant 0 : index
    %15 = vector.load %arg3[%c0_6, %c0_7] : memref<128x128xf32, #tpu.memory_space<vmem>>, vector<128x128xf32>
    %cst_8 = arith.constant dense<0.000000e+00> : vector<2x128xf32>
    %16 = tpu.matmul %14, %15, %cst_8 {dimension_numbers = #tpu.dot_dimension_numbers<[1], [0], [0], [1], [0, 0, 1, 1], [], []>} : vector<2x128xf32>, vector<128x128xf32>, vector<2x128xf32> -> vector<2x128xf32>
    %17 = arith.addf %13, %16 : vector<2x128xf32>
    %18 = arith.mulf %17, %11 : vector<2x128xf32>
    %19 = arith.negf %18 : vector<2x128xf32>
    %20 = math.exp %19 : vector<2x128xf32>
    %cst_9 = arith.constant 1.000000e+00 : f32
    %21 = vector.broadcast %cst_9 : f32 to vector<2x128xf32>
    %22 = arith.addf %21, %20 : vector<2x128xf32>
    %23 = arith.divf %21, %22 : vector<2x128xf32>
    %24 = arith.mulf %23, %11 : vector<2x128xf32>
    %cst_10 = arith.constant 1.000000e+00 : f32
    %25 = vector.broadcast %cst_10 : f32 to vector<2x128xf32>
    %26 = arith.subf %11, %25 : vector<2x128xf32>
    %27 = arith.subf %24, %26 : vector<2x128xf32>
    %c64_i32_11 = arith.constant 64 : i32
    %28 = tpu.dynamic_rotate %27 by %c64_i32_11 dim 1 : vector<2x128xf32>, i32 -> vector<2x128xf32>
    %c96_i32_12 = arith.constant 96 : i32
    %29 = tpu.dynamic_rotate %27 by %c96_i32_12 dim 1 : vector<2x128xf32>, i32 -> vector<2x128xf32>
    %c32_i32 = arith.constant 32 : i32
    %30 = tpu.dynamic_rotate %27 by %c32_i32 dim 1 : vector<2x128xf32>, i32 -> vector<2x128xf32>
    %31 = arith.mulf %27, %28 : vector<2x128xf32>
    %c0_13 = arith.constant 0 : index
    %c0_14 = arith.constant 0 : index
    %32 = vector.load %arg8[%c0_13, %c0_14] : memref<2x128xf32, #tpu.memory_space<vmem>>, vector<2x128xf32>
    %33 = arith.mulf %29, %32 : vector<2x128xf32>
    %34 = arith.addf %31, %33 : vector<2x128xf32>
    %35 = math.tanh %34 : vector<2x128xf32>
    %36 = arith.mulf %30, %35 : vector<2x128xf32>
    %c0_15 = arith.constant 0 : index
    %c0_16 = arith.constant 0 : index
    %37 = vector.load %arg8[%c0_15, %c0_16] : memref<2x128xf32, #tpu.memory_space<vmem>>, vector<2x128xf32>
    tpu.vector_store %arg8[%c0_15, %c0_16], %34 {strides = array<i32>} : memref<2x128xf32, #tpu.memory_space<vmem>>, vector<2x128xf32>,
    %c0_17 = arith.constant 0 : index
    %c0_18 = arith.constant 0 : index
    %38 = vector.load %arg7[%c0_17, %c0_18] : memref<2x128xf32, #tpu.memory_space<vmem>>, vector<2x128xf32>
    tpu.vector_store %arg7[%c0_17, %c0_18], %36 {strides = array<i32>} : memref<2x128xf32, #tpu.memory_space<vmem>>, vector<2x128xf32>,
    %39 = vector.extract_strided_slice %36 {offsets = [0, 0], sizes = [2, 32], strides = [1, 1]} : vector<2x128xf32> to vector<2x32xf32>
    %c0_19 = arith.constant 0 : index
    %c0_20 = arith.constant 0 : index
    %c0_21 = arith.constant 0 : index
    %40 = vector.load %arg5[%c0_19, %c0_20, %c0_21] : memref<1x2x32xf32, #tpu.memory_space<vmem>>, vector<1x2x32xf32>
    %41 = vector.shape_cast %40 : vector<1x2x32xf32> to vector<2x32xf32>
    %42 = vector.shape_cast %39 : vector<2x32xf32> to vector<1x2x32xf32>
    tpu.vector_store %arg5[%c0_19, %c0_20, %c0_21], %42 {strides = array<i32>} : memref<1x2x32xf32, #tpu.memory_space<vmem>>, vector<1x2x32xf32>,
    %c0_22 = arith.constant 0 : index
    %c0_23 = arith.constant 0 : index
    %c0_24 = arith.constant 0 : index
    %43 = vector.load %arg2[%c0_22, %c0_23, %c0_24] : memref<1x2x128xf32, #tpu.memory_space<vmem>>, vector<1x2x128xf32>
    %44 = vector.shape_cast %43 : vector<1x2x128xf32> to vector<2x128xf32>
    %c0_25 = arith.constant 0 : index
    %c0_26 = arith.constant 0 : index
    %45 = vector.load %arg9[%c0_25, %c0_26] : memref<2x128xf32, #tpu.memory_space<vmem>>, vector<2x128xf32>
    %c0_27 = arith.constant 0 : index
    %c0_28 = arith.constant 0 : index
    %46 = vector.load %arg4[%c0_27, %c0_28] : memref<128x128xf32, #tpu.memory_space<vmem>>, vector<128x128xf32>
    %cst_29 = arith.constant dense<0.000000e+00> : vector<2x128xf32>
    %47 = tpu.matmul %45, %46, %cst_29 {dimension_numbers = #tpu.dot_dimension_numbers<[1], [0], [0], [1], [0, 0, 1, 1], [], []>} : vector<2x128xf32>, vector<128x128xf32>, vector<2x128xf32> -> vector<2x128xf32>
    %48 = arith.addf %44, %47 : vector<2x128xf32>
    %49 = arith.mulf %48, %11 : vector<2x128xf32>
    %50 = arith.negf %49 : vector<2x128xf32>
    %51 = math.exp %50 : vector<2x128xf32>
    %cst_30 = arith.constant 1.000000e+00 : f32
    %52 = vector.broadcast %cst_30 : f32 to vector<2x128xf32>
    %53 = arith.addf %52, %51 : vector<2x128xf32>
    %54 = arith.divf %52, %53 : vector<2x128xf32>
    %55 = arith.mulf %54, %11 : vector<2x128xf32>
    %cst_31 = arith.constant 1.000000e+00 : f32
    %56 = vector.broadcast %cst_31 : f32 to vector<2x128xf32>
    %57 = arith.subf %11, %56 : vector<2x128xf32>
    %58 = arith.subf %55, %57 : vector<2x128xf32>
    %c64_i32_32 = arith.constant 64 : i32
    %59 = tpu.dynamic_rotate %58 by %c64_i32_32 dim 1 : vector<2x128xf32>, i32 -> vector<2x128xf32>
    %c96_i32_33 = arith.constant 96 : i32
    %60 = tpu.dynamic_rotate %58 by %c96_i32_33 dim 1 : vector<2x128xf32>, i32 -> vector<2x128xf32>
    %c32_i32_34 = arith.constant 32 : i32
    %61 = tpu.dynamic_rotate %58 by %c32_i32_34 dim 1 : vector<2x128xf32>, i32 -> vector<2x128xf32>
    %62 = arith.mulf %58, %59 : vector<2x128xf32>
    %c0_35 = arith.constant 0 : index
    %c0_36 = arith.constant 0 : index
    %63 = vector.load %arg10[%c0_35, %c0_36] : memref<2x128xf32, #tpu.memory_space<vmem>>, vector<2x128xf32>
    %64 = arith.mulf %60, %63 : vector<2x128xf32>
    %65 = arith.addf %62, %64 : vector<2x128xf32>
    %66 = math.tanh %65 : vector<2x128xf32>
    %67 = arith.mulf %61, %66 : vector<2x128xf32>
    %c0_37 = arith.constant 0 : index
    %c0_38 = arith.constant 0 : index
    %68 = vector.load %arg10[%c0_37, %c0_38] : memref<2x128xf32, #tpu.memory_space<vmem>>, vector<2x128xf32>
    tpu.vector_store %arg10[%c0_37, %c0_38], %65 {strides = array<i32>} : memref<2x128xf32, #tpu.memory_space<vmem>>, vector<2x128xf32>,
    %c0_39 = arith.constant 0 : index
    %c0_40 = arith.constant 0 : index
    %69 = vector.load %arg9[%c0_39, %c0_40] : memref<2x128xf32, #tpu.memory_space<vmem>>, vector<2x128xf32>
    tpu.vector_store %arg9[%c0_39, %c0_40], %67 {strides = array<i32>} : memref<2x128xf32, #tpu.memory_space<vmem>>, vector<2x128xf32>,
    %70 = vector.extract_strided_slice %67 {offsets = [0, 0], sizes = [2, 32], strides = [1, 1]} : vector<2x128xf32> to vector<2x32xf32>
    %c0_41 = arith.constant 0 : index
    %c0_42 = arith.constant 0 : index
    %c0_43 = arith.constant 0 : index
    %71 = vector.load %arg6[%c0_41, %c0_42, %c0_43] : memref<1x2x32xf32, #tpu.memory_space<vmem>>, vector<1x2x32xf32>
    %72 = vector.shape_cast %71 : vector<1x2x32xf32> to vector<2x32xf32>
    %73 = vector.shape_cast %70 : vector<2x32xf32> to vector<1x2x32xf32>
    tpu.vector_store %arg6[%c0_41, %c0_42, %c0_43], %73 {strides = array<i32>} : memref<1x2x32xf32, #tpu.memory_space<vmem>>, vector<1x2x32xf32>,
    return
  }
  func.func @transform_0(%arg0: i32) -> (i32, i32, i32) {
    %c0_i32 = arith.constant 0 : i32
    %c0_i32_0 = arith.constant 0 : i32
    %c0_i32_1 = arith.constant 0 : i32
    return %arg0, %c0_i32, %c0_i32_0 : i32, i32, i32
  }
  func.func @transform_1(%arg0: i32) -> (i32, i32, i32) {
    %c7_i32 = arith.constant 7 : i32
    %0 = arith.subi %c7_i32, %arg0 : i32
    %c0_i32 = arith.constant 0 : i32
    %c1_i32 = arith.constant 1 : i32
    %c0_i32_0 = arith.constant 0 : i32
    return %0, %c0_i32, %c1_i32 : i32, i32, i32
  }
  func.func @transform_2(%arg0: i32) -> (i32, i32) {
    %c0_i32 = arith.constant 0 : i32
    %c0_i32_0 = arith.constant 0 : i32
    %c0_i32_1 = arith.constant 0 : i32
    return %c0_i32, %c0_i32_0 : i32, i32
  }
  func.func @transform_3(%arg0: i32) -> (i32, i32) {
    %c0_i32 = arith.constant 0 : i32
    %c0_i32_0 = arith.constant 0 : i32
    %c0_i32_1 = arith.constant 0 : i32
    return %c0_i32, %c0_i32_0 : i32, i32
  }
  func.func @transform_4(%arg0: i32) -> (i32, i32, i32) {
    %c0_i32 = arith.constant 0 : i32
    %c0_i32_0 = arith.constant 0 : i32
    %c0_i32_1 = arith.constant 0 : i32
    return %arg0, %c0_i32, %c0_i32_0 : i32, i32, i32
  }
  func.func @transform_5(%arg0: i32) -> (i32, i32, i32) {
    %c7_i32 = arith.constant 7 : i32
    %0 = arith.subi %c7_i32, %arg0 : i32
    %c0_i32 = arith.constant 0 : i32
    %c0_i32_0 = arith.constant 0 : i32
    %c0_i32_1 = arith.constant 0 : i32
    return %0, %c0_i32, %c0_i32_0 : i32, i32, i32
  }
}

module attributes {stable_mosaic.version = 11 : i64} {
  func.func @_mlp_head_kernel(%arg0: i32, %arg1: memref<16x64xf32, #tpu.memory_space<vmem>>, %arg2: memref<64x128xbf16, #tpu.memory_space<vmem>>, %arg3: memref<1x128xf32, #tpu.memory_space<vmem>>, %arg4: memref<128x128xbf16, #tpu.memory_space<vmem>>, %arg5: memref<1x128xf32, #tpu.memory_space<vmem>>, %arg6: memref<128x128xbf16, #tpu.memory_space<vmem>>, %arg7: memref<1x128xf32, #tpu.memory_space<vmem>>, %arg8: memref<128x128xbf16, #tpu.memory_space<vmem>>, %arg9: memref<1x128xf32, #tpu.memory_space<vmem>>, %arg10: memref<16x128xf32, #tpu.memory_space<vmem>>) attributes {dimension_semantics = [#tpu.dimension_semantics<parallel>], iteration_bounds = array<i64: 1>, scalar_prefetch = 0 : i64, scratch_operands = 0 : i64, tpu.core_type = #tpu.core_type<tc>, window_params = [{transform_indices = @transform_0, window_bounds = array<i64: 16, 64>}, {pipeline_mode = #tpu.pipeline_mode<synchronous>, transform_indices = @transform_1, window_bounds = array<i64: 64, 128>}, {pipeline_mode = #tpu.pipeline_mode<synchronous>, transform_indices = @transform_2, window_bounds = array<i64: 1, 128>}, {pipeline_mode = #tpu.pipeline_mode<synchronous>, transform_indices = @transform_3, window_bounds = array<i64: 128, 128>}, {pipeline_mode = #tpu.pipeline_mode<synchronous>, transform_indices = @transform_4, window_bounds = array<i64: 1, 128>}, {pipeline_mode = #tpu.pipeline_mode<synchronous>, transform_indices = @transform_5, window_bounds = array<i64: 128, 128>}, {pipeline_mode = #tpu.pipeline_mode<synchronous>, transform_indices = @transform_6, window_bounds = array<i64: 1, 128>}, {pipeline_mode = #tpu.pipeline_mode<synchronous>, transform_indices = @transform_7, window_bounds = array<i64: 128, 128>}, {pipeline_mode = #tpu.pipeline_mode<synchronous>, transform_indices = @transform_8, window_bounds = array<i64: 1, 128>}, {transform_indices = @transform_9, window_bounds = array<i64: 16, 128>}]} {
    %c0 = arith.constant 0 : index
    %c0_0 = arith.constant 0 : index
    %0 = vector.load %arg1[%c0, %c0_0] : memref<16x64xf32, #tpu.memory_space<vmem>>, vector<16x64xf32>
    %1 = arith.truncf %0 : vector<16x64xf32> to vector<16x64xbf16>
    %c0_1 = arith.constant 0 : index
    %c0_2 = arith.constant 0 : index
    %2 = vector.load %arg2[%c0_1, %c0_2] : memref<64x128xbf16, #tpu.memory_space<vmem>>, vector<64x128xbf16>
    %cst = arith.constant dense<0.000000e+00> : vector<16x128xf32>
    %3 = tpu.matmul %1, %2, %cst {dimension_numbers = #tpu.dot_dimension_numbers<[1], [0], [0], [1], [0, 0, 1, 1], [], []>} : vector<16x64xbf16>, vector<64x128xbf16>, vector<16x128xf32> -> vector<16x128xf32>
    %c0_3 = arith.constant 0 : index
    %c0_4 = arith.constant 0 : index
    %4 = vector.load %arg3[%c0_3, %c0_4] : memref<1x128xf32, #tpu.memory_space<vmem>>, vector<1x128xf32>
    %5 = vector.broadcast %4 : vector<1x128xf32> to vector<16x128xf32>
    %6 = arith.addf %3, %5 : vector<16x128xf32>
    %cst_5 = arith.constant 0.000000e+00 : f32
    %7 = vector.broadcast %cst_5 : f32 to vector<16x128xf32>
    %8 = arith.maximumf %6, %7 : vector<16x128xf32>
    %9 = arith.truncf %8 : vector<16x128xf32> to vector<16x128xbf16>
    %c0_6 = arith.constant 0 : index
    %c0_7 = arith.constant 0 : index
    %10 = vector.load %arg4[%c0_6, %c0_7] : memref<128x128xbf16, #tpu.memory_space<vmem>>, vector<128x128xbf16>
    %cst_8 = arith.constant dense<0.000000e+00> : vector<16x128xf32>
    %11 = tpu.matmul %9, %10, %cst_8 {dimension_numbers = #tpu.dot_dimension_numbers<[1], [0], [0], [1], [0, 0, 1, 1], [], []>} : vector<16x128xbf16>, vector<128x128xbf16>, vector<16x128xf32> -> vector<16x128xf32>
    %c0_9 = arith.constant 0 : index
    %c0_10 = arith.constant 0 : index
    %12 = vector.load %arg5[%c0_9, %c0_10] : memref<1x128xf32, #tpu.memory_space<vmem>>, vector<1x128xf32>
    %13 = vector.broadcast %12 : vector<1x128xf32> to vector<16x128xf32>
    %14 = arith.addf %11, %13 : vector<16x128xf32>
    %cst_11 = arith.constant 0.000000e+00 : f32
    %15 = vector.broadcast %cst_11 : f32 to vector<16x128xf32>
    %16 = arith.maximumf %14, %15 : vector<16x128xf32>
    %17 = arith.truncf %16 : vector<16x128xf32> to vector<16x128xbf16>
    %c0_12 = arith.constant 0 : index
    %c0_13 = arith.constant 0 : index
    %18 = vector.load %arg6[%c0_12, %c0_13] : memref<128x128xbf16, #tpu.memory_space<vmem>>, vector<128x128xbf16>
    %cst_14 = arith.constant dense<0.000000e+00> : vector<16x128xf32>
    %19 = tpu.matmul %17, %18, %cst_14 {dimension_numbers = #tpu.dot_dimension_numbers<[1], [0], [0], [1], [0, 0, 1, 1], [], []>} : vector<16x128xbf16>, vector<128x128xbf16>, vector<16x128xf32> -> vector<16x128xf32>
    %c0_15 = arith.constant 0 : index
    %c0_16 = arith.constant 0 : index
    %20 = vector.load %arg7[%c0_15, %c0_16] : memref<1x128xf32, #tpu.memory_space<vmem>>, vector<1x128xf32>
    %21 = vector.broadcast %20 : vector<1x128xf32> to vector<16x128xf32>
    %22 = arith.addf %19, %21 : vector<16x128xf32>
    %cst_17 = arith.constant 0.000000e+00 : f32
    %23 = vector.broadcast %cst_17 : f32 to vector<16x128xf32>
    %24 = arith.maximumf %22, %23 : vector<16x128xf32>
    %25 = arith.truncf %24 : vector<16x128xf32> to vector<16x128xbf16>
    %c0_18 = arith.constant 0 : index
    %c0_19 = arith.constant 0 : index
    %26 = vector.load %arg8[%c0_18, %c0_19] : memref<128x128xbf16, #tpu.memory_space<vmem>>, vector<128x128xbf16>
    %cst_20 = arith.constant dense<0.000000e+00> : vector<16x128xf32>
    %27 = tpu.matmul %25, %26, %cst_20 {dimension_numbers = #tpu.dot_dimension_numbers<[1], [0], [0], [1], [0, 0, 1, 1], [], []>} : vector<16x128xbf16>, vector<128x128xbf16>, vector<16x128xf32> -> vector<16x128xf32>
    %c0_21 = arith.constant 0 : index
    %c0_22 = arith.constant 0 : index
    %28 = vector.load %arg9[%c0_21, %c0_22] : memref<1x128xf32, #tpu.memory_space<vmem>>, vector<1x128xf32>
    %29 = vector.broadcast %28 : vector<1x128xf32> to vector<16x128xf32>
    %30 = arith.addf %27, %29 : vector<16x128xf32>
    %cst_23 = arith.constant dense<0xFF800000> : vector<16xf32>
    %31 = vector.multi_reduction <maximumf>, %30, %cst_23 [1] : vector<16x128xf32> to vector<16xf32>
    %32 = vector.shape_cast %31 : vector<16xf32> to vector<16x1xf32>
    %33 = vector.broadcast %32 : vector<16x1xf32> to vector<16x128xf32>
    %34 = arith.subf %30, %33 : vector<16x128xf32>
    %35 = math.exp %34 : vector<16x128xf32>
    %cst_24 = arith.constant dense<0.000000e+00> : vector<16xf32>
    %36 = vector.multi_reduction <add>, %35, %cst_24 [1] : vector<16x128xf32> to vector<16xf32>
    %37 = vector.shape_cast %36 : vector<16xf32> to vector<16x1xf32>
    %38 = math.log %37 : vector<16x1xf32>
    %39 = vector.broadcast %38 : vector<16x1xf32> to vector<16x128xf32>
    %40 = arith.subf %34, %39 : vector<16x128xf32>
    %c0_25 = arith.constant 0 : index
    %c0_26 = arith.constant 0 : index
    %41 = vector.load %arg10[%c0_25, %c0_26] : memref<16x128xf32, #tpu.memory_space<vmem>>, vector<16x128xf32>
    tpu.vector_store %arg10[%c0_25, %c0_26], %40 {strides = array<i32>} : memref<16x128xf32, #tpu.memory_space<vmem>>, vector<16x128xf32>,
    return
  }
  func.func @transform_0(%arg0: i32) -> (i32, i32) {
    %c0_i32 = arith.constant 0 : i32
    %c0_i32_0 = arith.constant 0 : i32
    return %arg0, %c0_i32 : i32, i32
  }
  func.func @transform_1(%arg0: i32) -> (i32, i32) {
    %c0_i32 = arith.constant 0 : i32
    %c0_i32_0 = arith.constant 0 : i32
    %c0_i32_1 = arith.constant 0 : i32
    return %c0_i32, %c0_i32_0 : i32, i32
  }
  func.func @transform_2(%arg0: i32) -> (i32, i32) {
    %c0_i32 = arith.constant 0 : i32
    %c0_i32_0 = arith.constant 0 : i32
    %c0_i32_1 = arith.constant 0 : i32
    return %c0_i32, %c0_i32_0 : i32, i32
  }
  func.func @transform_3(%arg0: i32) -> (i32, i32) {
    %c0_i32 = arith.constant 0 : i32
    %c0_i32_0 = arith.constant 0 : i32
    %c0_i32_1 = arith.constant 0 : i32
    return %c0_i32, %c0_i32_0 : i32, i32
  }
  func.func @transform_4(%arg0: i32) -> (i32, i32) {
    %c0_i32 = arith.constant 0 : i32
    %c0_i32_0 = arith.constant 0 : i32
    %c0_i32_1 = arith.constant 0 : i32
    return %c0_i32, %c0_i32_0 : i32, i32
  }
  func.func @transform_5(%arg0: i32) -> (i32, i32) {
    %c0_i32 = arith.constant 0 : i32
    %c0_i32_0 = arith.constant 0 : i32
    %c0_i32_1 = arith.constant 0 : i32
    return %c0_i32, %c0_i32_0 : i32, i32
  }
  func.func @transform_6(%arg0: i32) -> (i32, i32) {
    %c0_i32 = arith.constant 0 : i32
    %c0_i32_0 = arith.constant 0 : i32
    %c0_i32_1 = arith.constant 0 : i32
    return %c0_i32, %c0_i32_0 : i32, i32
  }
  func.func @transform_7(%arg0: i32) -> (i32, i32) {
    %c0_i32 = arith.constant 0 : i32
    %c0_i32_0 = arith.constant 0 : i32
    %c0_i32_1 = arith.constant 0 : i32
    return %c0_i32, %c0_i32_0 : i32, i32
  }
  func.func @transform_8(%arg0: i32) -> (i32, i32) {
    %c0_i32 = arith.constant 0 : i32
    %c0_i32_0 = arith.constant 0 : i32
    %c0_i32_1 = arith.constant 0 : i32
    return %c0_i32, %c0_i32_0 : i32, i32
  }
  func.func @transform_9(%arg0: i32) -> (i32, i32) {
    %c0_i32 = arith.constant 0 : i32
    %c0_i32_0 = arith.constant 0 : i32
    return %arg0, %c0_i32 : i32, i32
  }
}

</mosaic_0001>

<llo_original>
// kernel: ner_classifier_crf_forward.5
$region0: #{ner_classifier_crf_forward.5}
  #allocation0 [shape = 'u32[]', space=smem, size = 0x4, offset = 0x4, fixed_abs, tag = 'smem constant byte address 0x4 - core index']
  #allocation1 [shape = 'u32[144,128]{1,0:T(1,128)}', space=vmem, size = 0x12000, scoped, tag = 'internal scratch']
  %s0 = inlined_call_operand.vmem [shape: f32[16,32], index: 0, kind: input, shape index: {}]
  %s1 = inlined_call_operand.vmem [shape: bf16[32,256], index: 1, kind: input, shape index: {}]
  %s2 = inlined_call_operand.vmem [shape: f32[1,256], index: 2, kind: input, shape index: {}]
  %s3 = inlined_call_operand.vmem [shape: f32[16,256], index: 3, kind: output, shape index: {}]
  %s4 = sld [smem:[#allocation0]]
  $region22: #{ner_classifier_crf_forward.5} parent=0
    _
  %s6 = ssub.s32 1, %s4
  %s7 = scalar_select 0, %s6, %s4
  // Predicated region
  $region2: #{ner_classifier_crf_forward.5} parent=0 // pred_check
    _
  $region3: #{ner_classifier_crf_forward.5} parent=0 // pred_check_branch
    %9 = sbr.rel (0) target = $region5
  $region4: #{ner_classifier_crf_forward.5} parent=0 // pred_region
    _
  $region5: #{ner_classifier_crf_forward.5} parent=0 // pred_fallthru
    _
  // Predicated region
  $region6: #{ner_classifier_crf_forward.5} parent=0 // pred_check
    _
  $region7: #{ner_classifier_crf_forward.5} parent=0 // pred_check_branch
    %11 = sbr.rel (0) target = $region9
  $region8: #{ner_classifier_crf_forward.5} parent=0 // pred_region
    _
  $region9: #{ner_classifier_crf_forward.5} parent=0 // pred_fallthru
    _
  // Predicated region
  $region10: #{ner_classifier_crf_forward.5} parent=0 // pred_check
    _
  $region11: #{ner_classifier_crf_forward.5} parent=0 // pred_check_branch
    %13 = sbr.rel (0) target = $region13
  $region12: #{ner_classifier_crf_forward.5} parent=0 // pred_region
    _
  $region13: #{ner_classifier_crf_forward.5} parent=0 // pred_fallthru
    _
  %v15 = vld [vmem:[%s0] sm:$0xff]
  %v16 = vld [vmem:[%s0 + $0x8] sm:$0xff]
  %v17 = vpack.c.bf16 %v16, %v15
  %v18 = vld [vmem:[%s1] sm:$0xff]
  %v19 = vld [vmem:[%s1 + $0x8] sm:$0xff]
  %v20 = vld [vmem:[%s1 + $0x10] sm:$0xff]
  %v21 = vld [vmem:[%s1 + $0x18] sm:$0xff]
  %v22 = vld [vmem:[%s2] sm:$0x3]
  %v24 = vlaneseq
  %v25 = vshrl.u32 %v24, 7
  %v26 = vsub.s32 0, %v25
  %v27 = vrot.slane %v22, %v26
  %v28 = vlaneseq
  %v29 = vshrl.u32 %v28, 7
  %v30 = vsub.s32 1, %v29
  %v31 = vrot.slane %v22, %v30
  %v38 = vunpack.c.l.b16 %v18
  %v39 = vunpack.c.h.b16 %v18
  %v40 = vunpack.c.l.b16 %v19
  %v41 = vunpack.c.h.b16 %v19
  %v42 = vunpack.c.l.b16 %v20
  %v43 = vunpack.c.h.b16 %v20
  %v44 = vunpack.c.l.b16 %v21
  %v45 = vunpack.c.h.b16 %v21
  %v46 = vpack.c.b16 %v40, %v38
  %v47 = vpack.c.b16 %v41, %v39
  %v48 = vpack.c.b16 %v44, %v42
  %v49 = vpack.c.b16 %v45, %v43
  %vm54 = vcmask 261120
  %v56 = vsel %vm54, %v17, 0
  %58 = vmatprep.subr.bf16.mxu0 0
  %59 = vmatpush1.bf16.msra.mxu0 0
  %60 = vmatprep.subr.bf16.mxu0 0
  %61 = vmatpush1.bf16.msra.mxu0 0
  %62 = vmatprep.subr.bf16.mxu0 0
  %63 = vmatpush1.bf16.msra.mxu0 0
  %64 = vmatprep.subr.bf16.mxu0 0
  %65 = vmatpush1.bf16.msra.mxu0 0
  %66 = vmatprep.subr.bf16.mxu0 0
  %67 = vmatpush1.bf16.msra.mxu0 0
  %68 = vmatprep.subr.bf16.mxu0 0
  %69 = vmatpush1.bf16.msra.mxu0 0
  %70 = vmatprep.subr.bf16.mxu0 %v49
  %71 = vmatpush1.bf16.msra.mxu0 %v48
  %72 = vmatprep.subr.bf16.mxu0 %v47
  %73 = vmatpush1.bf16.msra.mxu0 %v46
  %74 = vmatprep.subr.bf16.mxu0 0
  %75 = vmatpush2.bf16.msra.mxu0 0
  %76 = vmatprep.subr.bf16.mxu0 0
  %77 = vmatpush2.bf16.msra.mxu0 0
  %78 = vmatprep.subr.bf16.mxu0 0
  %79 = vmatpush2.bf16.msra.mxu0 0
  %80 = vmatprep.subr.bf16.mxu0 0
  %81 = vmatpush2.bf16.msra.mxu0 0
  %82 = vmatprep.subr.bf16.mxu0 0
  %83 = vmatpush2.bf16.msra.mxu0 0
  %84 = vmatprep.subr.bf16.mxu0 0
  %85 = vmatpush2.bf16.msra.mxu0 0
  %86 = vmatprep.subr.bf16.mxu0 0
  %87 = vmatpush2.bf16.msra.mxu0 0
  %88 = vmatprep.subr.bf16.mxu0 0
  %89 = vmatpush2.bf16.msra.mxu0 0
  %90 = vmatprep.mubr.bf16.mxu0 0
  %91 = vmatmul.mubr.bf16.gmra.mxu0 %v56
  %v92 = vpop.f32.mrf.mxu0
  %v93 = vadd.f32 %v27, %v92
  %v94 = vpop.f32.mrf.mxu0
  %v95 = vadd.f32 %v31, %v94
  %v96 = vpop.f32.mrf.mxu0
  %v97 = vadd.f32 %v27, %v96
  %v98 = vpop.f32.mrf.mxu0
  %v99 = vadd.f32 %v31, %v98
  %100 = vdwg.mxu0
  %101 = vst [vmem:[%s3] sm:$0xff] %v93
  %102 = vst [vmem:[%s3 + $0x8] sm:$0xff] %v95
  %103 = vst [vmem:[%s3 + $0x10] sm:$0xff] %v97
  %104 = vst [vmem:[%s3 + $0x18] sm:$0xff] %v99
  // Predicated region
  $region14: #{ner_classifier_crf_forward.5} parent=0 // pred_check
    _
  $region15: #{ner_classifier_crf_forward.5} parent=0 // pred_check_branch
    %106 = sbr.rel (0) target = $region17
  $region16: #{ner_classifier_crf_forward.5} parent=0 // pred_region
    _
  $region17: #{ner_classifier_crf_forward.5} parent=0 // pred_fallthru
    _
  // Predicated region
  $region18: #{ner_classifier_crf_forward.5} parent=0 // pred_check
    _
  $region19: #{ner_classifier_crf_forward.5} parent=0 // pred_check_branch
    %108 = sbr.rel (0) target = $region21
  $region20: #{ner_classifier_crf_forward.5} parent=0 // pred_region
    _
  $region21: #{ner_classifier_crf_forward.5} parent=0 // pred_fallthru
    _

// kernel: ner_classifier_crf_forward.6
$region0: #{ner_classifier_crf_forward.6}
  #allocation0 [shape = 'u32[]', space=smem, size = 0x4, offset = 0x4, fixed_abs, tag = 'smem constant byte address 0x4 - core index']
  #allocation1 [shape = 'u32[144,128]{1,0:T(1,128)}', space=vmem, size = 0x12000, scoped, tag = 'internal scratch']
  #allocation2 [shape = 'f32[2,128]{1,0:T(2,128)}', space=vmem, size = 0x400, scoped, tag = 'scratch operand']
  #allocation3 [shape = 'f32[2,128]{1,0:T(2,128)}', space=vmem, size = 0x400, scoped, tag = 'scratch operand']
  #allocation4 [shape = 'f32[2,128]{1,0:T(2,128)}', space=vmem, size = 0x400, scoped, tag = 'scratch operand']
  #allocation5 [shape = 'f32[2,128]{1,0:T(2,128)}', space=vmem, size = 0x400, scoped, tag = 'scratch operand']
  %s0 = inlined_call_operand.vmem [shape: f32[8,2,256], index: 0, kind: input, shape index: {}, may-alias: {0,1}]
  %s1 = inlined_call_operand.vmem [shape: f32[8,2,256], index: 1, kind: input, shape index: {}, may-alias: {0,1}]
  %s2 = inlined_call_operand.vmem [shape: f32[128,128], index: 2, kind: input, shape index: {}]
  %s3 = inlined_call_operand.hbm [shape: f32[128,128], index: 3, kind: input, shape index: {}]
  %s4 = inlined_call_operand.vmem [shape: f32[8,2,32], index: 4, kind: output, shape index: {0}]
  %s5 = inlined_call_operand.vmem [shape: f32[8,2,32], index: 5, kind: output, shape index: {1}]
  %6 = xla_tuple %s4, %s5
  %s7 = sld [smem:[#allocation0]]
  $region65: #{ner_classifier_crf_forward.6} parent=0
    _
  %s9 = ssub.s32 1, %s7
  %s10 = scalar_select 0, %s9, %s7
  $region1: #{ner_classifier_crf_forward.6} parent=0
    #allocation6 [shape = 'u8[65536]{0}', space=vmem, size = 0x10000, scoped, tag = 'input window, operand 3, single buffered']
    #allocation7 [shape = 's32[2]{0}', space=sflag, size = 0x8, scoped, tag = 'scoped memory for ner_classifier_crf_forward.6']
    %11 = vsyncpa [#allocation7], 0
    loop: start=0, step=1, limit=10
    $region2: #{ner_classifier_crf_forward.6} parent=1 // loop_pre_header
      _
    $region3: #{ner_classifier_crf_forward.6} parent=1 // loop_header
      %s13 = sphi 0, %s17
      %p14 = scmp.ge.s32.totalorder %s13, 10
      %s23 = sphi 0, %s25
      %s26 = sphi 0, %s23
      %s27 = sphi 0, %s26
      %s43 = sphi 0, %s27
      %s51 = sphi 0, %s53
      %s54 = sphi 0, %s51
      %s55 = sphi 0, %s54
      %s71 = sphi 0, %s55
      %s75 = sphi 0, %s75
      %s77 = sphi 0, %s75
      %s78 = sphi 0, %s77
      %s92 = sphi 0, %s78
      %s96 = sphi 0, %s96
      %s98 = sphi 0, %s96
      %s99 = sphi 0, %s98
      %s113 = sphi 0, %s99
      %s119 = sphi 0, %s121
      %s122 = sphi 0, %s119
      %s123 = sphi 0, %s122
      %s139 = sphi 0, %s123
      %s147 = sphi 0, %s149
      %s150 = sphi 0, %s147
      %s151 = sphi 0, %s150
      %s167 = sphi 0, %s151
    $region4: #{ner_classifier_crf_forward.6} parent=1 // loop_header_branch
      %16 = sbr.rel (%p14) target = $region8
    $region5: #{ner_classifier_crf_forward.6} parent=1 // loop_body
      %s18 = ssub.s32 %s13, 1
      %s19 = ssub.s32 %s13, 2
      %s20 = sadd.s32 %s13, 1
      %s21 = ssub.s32 %s13, %s20
      %p22 = scmp.eq.s32.totalorder %s21, 0
      %s24 = sadd.s32 %s23, 1
      %s25 = scalar_select %p22, %s23, %s24
      %p28 = pneg %p22
      %p29 = scmp.eq.s32.totalorder %s13, 7
      %p30 = por %p28, %p29
      %p31 = scmp.ne.s32.totalorder %s23, %s26
      %p32 = scmp.eq.s32.totalorder %s13, 0
      %p33 = por %p31, %p32
      %p34 = scmp.ne.s32.totalorder %s23, %s26
      %p35 = scmp.eq.s32.totalorder %s18, 7
      %p36 = por %p34, %p35
      %p37 = scmp.ne.s32.totalorder %s26, %s27
      %p38 = scmp.eq.s32.totalorder %s18, 0
      %p39 = por %p37, %p38
      %p40 = scmp.ne.s32.totalorder %s26, %s27
      %p41 = scmp.eq.s32.totalorder %s19, 7
      %p42 = por %p40, %p41
      %p44 = scmp.ne.s32.totalorder %s27, %s43
      %p45 = scmp.eq.s32.totalorder %s19, 0
      %p46 = por %p44, %p45
      %s47 = ssub.s32 7, %s13
      %s48 = ssub.s32 7, %s20
      %s49 = ssub.s32 %s47, %s48
      %p50 = scmp.eq.s32.totalorder %s49, 0
      %s52 = sadd.s32 %s51, 1
      %s53 = scalar_select %p50, %s51, %s52
      %p56 = pneg %p50
      %p57 = scmp.eq.s32.totalorder %s13, 7
      %p58 = por %p56, %p57
      %p59 = scmp.ne.s32.totalorder %s51, %s54
      %p60 = scmp.eq.s32.totalorder %s13, 0
      %p61 = por %p59, %p60
      %p62 = scmp.ne.s32.totalorder %s51, %s54
      %p63 = scmp.eq.s32.totalorder %s18, 7
      %p64 = por %p62, %p63
      %p65 = scmp.ne.s32.totalorder %s54, %s55
      %p66 = scmp.eq.s32.totalorder %s18, 0
      %p67 = por %p65, %p66
      %p68 = scmp.ne.s32.totalorder %s54, %s55
      %p69 = scmp.eq.s32.totalorder %s19, 7
      %p70 = por %p68, %p69
      %p72 = scmp.ne.s32.totalorder %s55, %s71
      %p73 = scmp.eq.s32.totalorder %s19, 0
      %p74 = por %p72, %p73
      %s76 = sadd.s32 %s75, 1
      %p79 = scmp.eq.s32.totalorder %s13, 7
      %p80 = scmp.ne.s32.totalorder %s75, %s77
      %p81 = scmp.eq.s32.totalorder %s13, 0
      %p82 = por %p80, %p81
      %p83 = scmp.ne.s32.totalorder %s75, %s77
      %p84 = scmp.eq.s32.totalorder %s18, 7
      %p85 = por %p83, %p84
      %p86 = scmp.ne.s32.totalorder %s77, %s78
      %p87 = scmp.eq.s32.totalorder %s18, 0
      %p88 = por %p86, %p87
      %p89 = scmp.ne.s32.totalorder %s77, %s78
      %p90 = scmp.eq.s32.totalorder %s19, 7
      %p91 = por %p89, %p90
      %p93 = scmp.ne.s32.totalorder %s78, %s92
      %p94 = scmp.eq.s32.totalorder %s19, 0
      %p95 = por %p93, %p94
      %s97 = sadd.s32 %s96, 1
      %p100 = scmp.eq.s32.totalorder %s13, 7
      %p101 = scmp.ne.s32.totalorder %s96, %s98
      %p102 = scmp.eq.s32.totalorder %s13, 0
      %p103 = por %p101, %p102
      %p104 = scmp.ne.s32.totalorder %s96, %s98
      %p105 = scmp.eq.s32.totalorder %s18, 7
      %p106 = por %p104, %p105
      %p107 = scmp.ne.s32.totalorder %s98, %s99
      %p108 = scmp.eq.s32.totalorder %s18, 0
      %p109 = por %p107, %p108
      %p110 = scmp.ne.s32.totalorder %s98, %s99
      %p111 = scmp.eq.s32.totalorder %s19, 7
      %p112 = por %p110, %p111
      %p114 = scmp.ne.s32.totalorder %s99, %s113
      %p115 = scmp.eq.s32.totalorder %s19, 0
      %p116 = por %p114, %p115
      %s117 = ssub.s32 %s13, %s20
      %p118 = scmp.eq.s32.totalorder %s117, 0
      %s120 = sadd.s32 %s119, 1
      %s121 = scalar_select %p118, %s119, %s120
      %p124 = pneg %p118
      %p125 = scmp.eq.s32.totalorder %s13, 7
      %p126 = por %p124, %p125
      %p127 = scmp.ne.s32.totalorder %s119, %s122
      %p128 = scmp.eq.s32.totalorder %s13, 0
      %p129 = por %p127, %p128
      %p130 = scmp.ne.s32.totalorder %s119, %s122
      %p131 = scmp.eq.s32.totalorder %s18, 7
      %p132 = por %p130, %p131
      %p133 = scmp.ne.s32.totalorder %s122, %s123
      %p134 = scmp.eq.s32.totalorder %s18, 0
      %p135 = por %p133, %p134
      %p136 = scmp.ne.s32.totalorder %s122, %s123
      %p137 = scmp.eq.s32.totalorder %s19, 7
      %p138 = por %p136, %p137
      %p140 = scmp.ne.s32.totalorder %s123, %s139
      %p141 = scmp.eq.s32.totalorder %s19, 0
      %p142 = por %p140, %p141
      %s143 = ssub.s32 7, %s13
      %s144 = ssub.s32 7, %s20
      %s145 = ssub.s32 %s143, %s144
      %p146 = scmp.eq.s32.totalorder %s145, 0
      %s148 = sadd.s32 %s147, 1
      %s149 = scalar_select %p146, %s147, %s148
      %p152 = pneg %p146
      %p153 = scmp.eq.s32.totalorder %s13, 7
      %p154 = por %p152, %p153
      %p155 = scmp.ne.s32.totalorder %s147, %s150
      %p156 = scmp.eq.s32.totalorder %s13, 0
      %p157 = por %p155, %p156
      %p158 = scmp.ne.s32.totalorder %s147, %s150
      %p159 = scmp.eq.s32.totalorder %s18, 7
      %p160 = por %p158, %p159
      %p161 = scmp.ne.s32.totalorder %s150, %s151
      %p162 = scmp.eq.s32.totalorder %s18, 0
      %p163 = por %p161, %p162
      %p164 = scmp.ne.s32.totalorder %s150, %s151
      %p165 = scmp.eq.s32.totalorder %s19, 7
      %p166 = por %p164, %p165
      %p168 = scmp.ne.s32.totalorder %s151, %s167
      %p169 = scmp.eq.s32.totalorder %s19, 0
      %p170 = por %p168, %p169
      %p171 = scmp.le.s32.totalorder 1, %s13
      %p172 = scmp.lt.s32.totalorder %s13, 9
      %p173 = pnand %p171, %p172
      %p174 = pneg %p173
      // Predicated region
      $region9: #{ner_classifier_crf_forward.6} parent=5 // pred_check
        _
      $region10: #{ner_classifier_crf_forward.6} parent=5 // pred_check_branch
        %176 = sbr.rel (%p173) target = $region12
      $region11: #{ner_classifier_crf_forward.6} parent=5 // pred_region
        %s177 = ssub.s32 %s13, 1
        // Predicated region
        $region13: #{ner_classifier_crf_forward.6} parent=11 // pred_check
          %p178 = pneg %p88
        $region14: #{ner_classifier_crf_forward.6} parent=11 // pred_check_branch
          %180 = sbr.rel (%p178) target = $region16
        $region15: #{ner_classifier_crf_forward.6} parent=11 // pred_region
          _
        $region16: #{ner_classifier_crf_forward.6} parent=11 // pred_fallthru
          _
        // Predicated region
        $region17: #{ner_classifier_crf_forward.6} parent=11 // pred_check
          %p181 = pneg %p109
        $region18: #{ner_classifier_crf_forward.6} parent=11 // pred_check_branch
          %183 = sbr.rel (%p181) target = $region20
        $region19: #{ner_classifier_crf_forward.6} parent=11 // pred_region
          %s185 = ssub.s32 2048, 2048
          %186 = vsyncadd [#allocation7], %s185
          %s187 = sshll.u32 [#allocation6], 4
          %s188 = int_to_ptr.vmem [resolvable:$true] %s187
          %193 = dma.hbm_to_vmem [thread:$0]  %s3, 2048, %s188, [#allocation7], 128, 128, 8
        $region20: #{ner_classifier_crf_forward.6} parent=11 // pred_fallthru
          _
      $region12: #{ner_classifier_crf_forward.6} parent=5 // pred_fallthru
        _
      %p194 = scmp.lt.s32.totalorder %s13, 8
      // Predicated region
      $region21: #{ner_classifier_crf_forward.6} parent=5 // pred_check
        %p195 = pneg %p194
      $region22: #{ner_classifier_crf_forward.6} parent=5 // pred_check_branch
        %197 = sbr.rel (%p195) target = $region24
      $region23: #{ner_classifier_crf_forward.6} parent=5 // pred_region
        // Predicated region
        $region25: #{ner_classifier_crf_forward.6} parent=23 // pred_check
          %p198 = pneg %p33
        $region26: #{ner_classifier_crf_forward.6} parent=23 // pred_check_branch
          %200 = sbr.rel (%p198) target = $region28
        $region27: #{ner_classifier_crf_forward.6} parent=23 // pred_region
          %p201 = scmp.lt.s32.totalorder %s13, 7
          %s202 = scalar_select %p201, %s13, 7
          %s203 = smul.addr %s202, 2
          %s204 = smul.addr %s203, 2
          %s205 = scalar_lea.vmem %s0, %s204
        $region28: #{ner_classifier_crf_forward.6} parent=23 // pred_fallthru
          _
        // Predicated region
        $region29: #{ner_classifier_crf_forward.6} parent=23 // pred_check
          %p206 = pneg %p61
        $region30: #{ner_classifier_crf_forward.6} parent=23 // pred_check_branch
          %208 = sbr.rel (%p206) target = $region32
        $region31: #{ner_classifier_crf_forward.6} parent=23 // pred_region
          %s209 = ssub.s32 7, %s13
          %p210 = scmp.lt.s32.totalorder %s209, 7
          %s211 = scalar_select %p210, %s209, 7
          %s212 = smul.addr %s211, 2
          %s213 = sadd.s32 1, %s212
          %s214 = smul.addr %s213, 2
          %s215 = scalar_lea.vmem %s1, %s214
          %s216 = ssub.s32 7, %s13
        $region32: #{ner_classifier_crf_forward.6} parent=23 // pred_fallthru
          _
      $region24: #{ner_classifier_crf_forward.6} parent=5 // pred_fallthru
        _
      %p217 = scmp.le.s32.totalorder 1, %s13
      %p218 = scmp.lt.s32.totalorder %s13, 9
      %p219 = pnand %p217, %p218
      %p220 = pneg %p219
      // Predicated region
      $region33: #{ner_classifier_crf_forward.6} parent=5 // pred_check
        _
      $region34: #{ner_classifier_crf_forward.6} parent=5 // pred_check_branch
        %222 = sbr.rel (%p219) target = $region36
      $region35: #{ner_classifier_crf_forward.6} parent=5 // pred_region
        %s223 = ssub.s32 %s13, 1
        // Predicated region
        $region37: #{ner_classifier_crf_forward.6} parent=35 // pred_check
          %p224 = pneg %p109
        $region38: #{ner_classifier_crf_forward.6} parent=35 // pred_check_branch
          %226 = sbr.rel (%p224) target = $region40
        $region39: #{ner_classifier_crf_forward.6} parent=35 // pred_region
          %227 = dma.done [#allocation7], 2048
        $region40: #{ner_classifier_crf_forward.6} parent=35 // pred_fallthru
          _
        %p228 = scmp.lt.s32.totalorder %s18, 7
        %s229 = scalar_select %p228, %s18, 7
        %s230 = smul.addr %s229, 2
        %s231 = smul.addr %s230, 2
        %s232 = scalar_lea.vmem %s0, %s231
        %p233 = pneg %p39
        %p234 = pneg %p36
        %s235 = ssub.s32 7, %s18
        %p236 = scmp.lt.s32.totalorder %s235, 7
        %s237 = scalar_select %p236, %s235, 7
        %s238 = smul.addr %s237, 2
        %s239 = sadd.s32 1, %s238
        %s240 = smul.addr %s239, 2
        %s241 = scalar_lea.vmem %s1, %s240
        %p242 = pneg %p67
        %p243 = pneg %p64
        %p244 = pneg %p88
        %p245 = pneg %p85
        %p246 = pneg %p109
        %p247 = pneg %p106
        %p248 = pneg %p135
        %p249 = pneg %p132
        %p250 = scmp.lt.s32.totalorder %s18, 7
        %s251 = scalar_select %p250, %s18, 7
        %s252 = smul.addr %s251, 2
        %s253 = scalar_lea.vmem %s4, %s252
        %p254 = pneg %p163
        %p255 = pneg %p160
        %s256 = ssub.s32 7, %s18
        %p257 = scmp.lt.s32.totalorder %s256, 7
        %s258 = scalar_select %p257, %s256, 7
        %s259 = smul.addr %s258, 2
        %s260 = scalar_lea.vmem %s5, %s259
        %p261 = scmp.lt.s32.totalorder %s18, 7
        %s262 = scalar_select %p261, %s18, 7
        %s263 = smul.addr %s262, 2
        %s264 = smul.addr %s263, 2
        %s265 = scalar_lea.vmem %s0, %s264
        %s266 = ssub.s32 7, %s18
        %p267 = scmp.lt.s32.totalorder %s266, 7
        %s268 = scalar_select %p267, %s266, 7
        %s269 = smul.addr %s268, 2
        %s270 = sadd.s32 1, %s269
        %s271 = smul.addr %s270, 2
        %s272 = scalar_lea.vmem %s1, %s271
        %s273 = ssub.s32 7, %s18
        %p274 = scmp.lt.s32.totalorder %s18, 7
        %s275 = scalar_select %p274, %s18, 7
        %s276 = smul.addr %s275, 2
        %s277 = scalar_lea.vmem %s4, %s276
        %s278 = ssub.s32 7, %s18
        %p279 = scmp.lt.s32.totalorder %s278, 7
        %s280 = scalar_select %p279, %s278, 7
        %s281 = smul.addr %s280, 2
        %s282 = scalar_lea.vmem %s5, %s281
        %s283 = ssub.s32 7, %s18
        %p284 = scmp.eq.s32.totalorder %s18, 0
        // Predicated region
        $region41: #{ner_classifier_crf_forward.6} parent=35 // pred_check
          %p285 = pneg %p284
        $region42: #{ner_classifier_crf_forward.6} parent=35 // pred_check_branch
          %287 = sbr.rel (%p285) target = $region44
        $region43: #{ner_classifier_crf_forward.6} parent=35 // pred_region
          %288 = vst [vmem:[#allocation2] sm:$0x3] 0.0
          %289 = vst [vmem:[#allocation3] sm:$0x3] 0.0
          %290 = vst [vmem:[#allocation4] sm:$0x3] 0.0
          %291 = vst [vmem:[#allocation5] sm:$0x3] 0.0
        $region44: #{ner_classifier_crf_forward.6} parent=35 // pred_fallthru
          _
        %v292 = vlaneseq
        %v293 = vand.u32 %v292, 127
        %vm294 = vcmp.ge.s32.totalorder %v293, 64
        %vm295 = vcmp.lt.s32.totalorder %v293, 96
        %vm296 = vmand %vm294, %vm295
        %v297 = vsel %vm296, 2.0, 1.0
        %v298 = vld [vmem:[%s265] sm:$0x3]
        %v299 = vld [vmem:[#allocation2] sm:$0x3]
        %v300 = vld [vmem:[%s2] sm:$0xff]
        %v301 = vld [vmem:[%s2 + $0x8] sm:$0xff]
        %v302 = vld [vmem:[%s2 + $0x10] sm:$0xff]
        %v303 = vld [vmem:[%s2 + $0x18] sm:$0xff]
        %v304 = vld [vmem:[%s2 + $0x20] sm:$0xff]
        %v305 = vld [vmem:[%s2 + $0x28] sm:$0xff]
        %v306 = vld [vmem:[%s2 + $0x30] sm:$0xff]
        %v307 = vld [vmem:[%s2 + $0x38] sm:$0xff]
        %v308 = vld [vmem:[%s2 + $0x40] sm:$0xff]
        %v309 = vld [vmem:[%s2 + $0x48] sm:$0xff]
        %v310 = vld [vmem:[%s2 + $0x50] sm:$0xff]
        %v311 = vld [vmem:[%s2 + $0x58] sm:$0xff]
        %v312 = vld [vmem:[%s2 + $0x60] sm:$0xff]
        %v313 = vld [vmem:[%s2 + $0x68] sm:$0xff]
        %v314 = vld [vmem:[%s2 + $0x70] sm:$0xff]
        %v315 = vld [vmem:[%s2 + $0x78] sm:$0xff]
        %316 = vmatprep.subr.mxu0 0.0
        %317 = vmatpush1.msra.mxu0 %v315
        %318 = vmatprep.subr.mxu0 0.0
        %319 = vmatpush1.msra.mxu0 %v314
        %320 = vmatprep.subr.mxu0 0.0
        %321 = vmatpush1.msra.mxu0 %v313
        %322 = vmatprep.subr.mxu0 0.0
        %323 = vmatpush1.msra.mxu0 %v312
        %324 = vmatprep.subr.mxu0 0.0
        %325 = vmatpush1.msra.mxu0 %v311
        %326 = vmatprep.subr.mxu0 0.0
        %327 = vmatpush1.msra.mxu0 %v310
        %328 = vmatprep.subr.mxu0 0.0
        %329 = vmatpush1.msra.mxu0 %v309
        %330 = vmatprep.subr.mxu0 0.0
        %331 = vmatpush1.msra.mxu0 %v308
        %332 = vmatprep.subr.mxu0 0.0
        %333 = vmatpush1.msra.mxu0 %v307
        %334 = vmatprep.subr.mxu0 0.0
        %335 = vmatpush1.msra.mxu0 %v306
        %336 = vmatprep.subr.mxu0 0.0
        %337 = vmatpush1.msra.mxu0 %v305
        %338 = vmatprep.subr.mxu0 0.0
        %339 = vmatpush1.msra.mxu0 %v304
        %340 = vmatprep.subr.mxu0 0.0
        %341 = vmatpush1.msra.mxu0 %v303
        %342 = vmatprep.subr.mxu0 0.0
        %343 = vmatpush1.msra.mxu0 %v302
        %344 = vmatprep.subr.mxu0 0.0
        %345 = vmatpush1.msra.mxu0 %v301
        %346 = vmatprep.subr.mxu0 0.0
        %347 = vmatpush1.msra.mxu0 %v300
        %348 = vmatprep.subr.mxu0 0.0
        %349 = vmatpush2.msra.mxu0 0.0
        %350 = vmatprep.subr.mxu0 0.0
        %351 = vmatpush2.msra.mxu0 0.0
        %352 = vmatprep.subr.mxu0 0.0
        %353 = vmatpush2.msra.mxu0 0.0
        %354 = vmatprep.subr.mxu0 0.0
        %355 = vmatpush2.msra.mxu0 0.0
        %356 = vmatprep.subr.mxu0 0.0
        %357 = vmatpush2.msra.mxu0 0.0
        %358 = vmatprep.subr.mxu0 0.0
        %359 = vmatpush2.msra.mxu0 0.0
        %360 = vmatprep.subr.mxu0 0.0
        %361 = vmatpush2.msra.mxu0 0.0
        %362 = vmatprep.subr.mxu0 0.0
        %363 = vmatpush2.msra.mxu0 0.0
        %364 = vmatprep.subr.mxu0 0.0
        %365 = vmatpush2.msra.mxu0 0.0
        %366 = vmatprep.subr.mxu0 0.0
        %367 = vmatpush2.msra.mxu0 0.0
        %368 = vmatprep.subr.mxu0 0.0
        %369 = vmatpush2.msra.mxu0 0.0
        %370 = vmatprep.subr.mxu0 0.0
        %371 = vmatpush2.msra.mxu0 0.0
        %372 = vmatprep.subr.mxu0 0.0
        %373 = vmatpush2.msra.mxu0 0.0
        %374 = vmatprep.subr.mxu0 0.0
        %375 = vmatpush2.msra.mxu0 0.0
        %376 = vmatprep.subr.mxu0 0.0
        %377 = vmatpush2.msra.mxu0 0.0
        %378 = vmatprep.subr.mxu0 0.0
        %379 = vmatpush2.msra.mxu0 0.0
        %380 = vmatprep.mubr.f32.mxu0 0.0
        %381 = vmatmul.mubr.f32.gmra.mxu0 %v299
        %v382 = vpop.f32.mrf.mxu0
        %v383 = vadd.f32 0.0, %v382
        %v384 = vpop.f32.mrf.mxu0
        %385 = vdwg.mxu0
        %v386 = vadd.f32 %v298, %v383
        %v387 = vmul.f32 %v386, %v297
        %v388 = vxor.u32 %v387, 2147483648
        %v389 = vmul.f32 %v388, 1.442695
        %v390 = vpow.pop %v389
        %v391 = vadd.f32 %v390, 1.0
        %v392 = vrcp.pop %v391
        %v393 = vmul.f32 1.0, %v392
        %v394 = vmul.f32 %v393, %v297
        %v395 = vsub.f32 %v297, 1.0
        %v396 = vsub.f32 %v394, %v395
        %397 = vrot.lane.b32.xlu0 %v396, 64
        %v398 = vpop.permute.xlu0 %397
        %399 = vrot.lane.b32.xlu0 %v396, 96
        %v400 = vpop.permute.xlu0 %399
        %401 = vrot.lane.b32.xlu0 %v396, 32
        %v402 = vpop.permute.xlu0 %401
        %v403 = vmul.f32 %v396, %v398
        %v404 = vld [vmem:[#allocation3] sm:$0x3]
        %v405 = vmul.f32 %v400, %v404
        %v406 = vadd.f32 %v403, %v405
        %v407 = vtanh.pop %v406
        %v408 = vmul.f32 %v402, %v407
        %409 = vst [vmem:[#allocation3] sm:$0x3] %v406
        %410 = vst [vmem:[#allocation2] sm:$0x3] %v408
        %vm411 = vcmask 254976
        %412 = vst.msk [vmem:[%s277] sm:$0x3] %vm411, %v408
        %v413 = vld [vmem:[%s272] sm:$0x3]
        %v414 = vld [vmem:[#allocation4] sm:$0x3]
        %v415 = vld [vmem:[#allocation6] sm:$0xff]
        %v416 = vld [vmem:[#allocation6 + $0x8] sm:$0xff]
        %v417 = vld [vmem:[#allocation6 + $0x10] sm:$0xff]
        %v418 = vld [vmem:[#allocation6 + $0x18] sm:$0xff]
        %v419 = vld [vmem:[#allocation6 + $0x20] sm:$0xff]
        %v420 = vld [vmem:[#allocation6 + $0x28] sm:$0xff]
        %v421 = vld [vmem:[#allocation6 + $0x30] sm:$0xff]
        %v422 = vld [vmem:[#allocation6 + $0x38] sm:$0xff]
        %v423 = vld [vmem:[#allocation6 + $0x40] sm:$0xff]
        %v424 = vld [vmem:[#allocation6 + $0x48] sm:$0xff]
        %v425 = vld [vmem:[#allocation6 + $0x50] sm:$0xff]
        %v426 = vld [vmem:[#allocation6 + $0x58] sm:$0xff]
        %v427 = vld [vmem:[#allocation6 + $0x60] sm:$0xff]
        %v428 = vld [vmem:[#allocation6 + $0x68] sm:$0xff]
        %v429 = vld [vmem:[#allocation6 + $0x70] sm:$0xff]
        %v430 = vld [vmem:[#allocation6 + $0x78] sm:$0xff]
        %431 = vmatprep.subr.mxu0 0.0
        %432 = vmatpush1.msra.mxu0 %v430
        %433 = vmatprep.subr.mxu0 0.0
        %434 = vmatpush1.msra.mxu0 %v429
        %435 = vmatprep.subr.mxu0 0.0
        %436 = vmatpush1.msra.mxu0 %v428
        %437 = vmatprep.subr.mxu0 0.0
        %438 = vmatpush1.msra.mxu0 %v427
        %439 = vmatprep.subr.mxu0 0.0
        %440 = vmatpush1.msra.mxu0 %v426
        %441 = vmatprep.subr.mxu0 0.0
        %442 = vmatpush1.msra.mxu0 %v425
        %443 = vmatprep.subr.mxu0 0.0
        %444 = vmatpush1.msra.mxu0 %v424
        %445 = vmatprep.subr.mxu0 0.0
        %446 = vmatpush1.msra.mxu0 %v423
        %447 = vmatprep.subr.mxu0 0.0
        %448 = vmatpush1.msra.mxu0 %v422
        %449 = vmatprep.subr.mxu0 0.0
        %450 = vmatpush1.msra.mxu0 %v421
        %451 = vmatprep.subr.mxu0 0.0
        %452 = vmatpush1.msra.mxu0 %v420
        %453 = vmatprep.subr.mxu0 0.0
        %454 = vmatpush1.msra.mxu0 %v419
        %455 = vmatprep.subr.mxu0 0.0
        %456 = vmatpush1.msra.mxu0 %v418
        %457 = vmatprep.subr.mxu0 0.0
        %458 = vmatpush1.msra.mxu0 %v417
        %459 = vmatprep.subr.mxu0 0.0
        %460 = vmatpush1.msra.mxu0 %v416
        %461 = vmatprep.subr.mxu0 0.0
        %462 = vmatpush1.msra.mxu0 %v415
        %463 = vmatprep.subr.mxu0 0.0
        %464 = vmatpush2.msra.mxu0 0.0
        %465 = vmatprep.subr.mxu0 0.0
        %466 = vmatpush2.msra.mxu0 0.0
        %467 = vmatprep.subr.mxu0 0.0
        %468 = vmatpush2.msra.mxu0 0.0
        %469 = vmatprep.subr.mxu0 0.0
        %470 = vmatpush2.msra.mxu0 0.0
        %471 = vmatprep.subr.mxu0 0.0
        %472 = vmatpush2.msra.mxu0 0.0
        %473 = vmatprep.subr.mxu0 0.0
        %474 = vmatpush2.msra.mxu0 0.0
        %475 = vmatprep.subr.mxu0 0.0
        %476 = vmatpush2.msra.mxu0 0.0
        %477 = vmatprep.subr.mxu0 0.0
        %478 = vmatpush2.msra.mxu0 0.0
        %479 = vmatprep.subr.mxu0 0.0
        %480 = vmatpush2.msra.mxu0 0.0
        %481 = vmatprep.subr.mxu0 0.0
        %482 = vmatpush2.msra.mxu0 0.0
        %483 = vmatprep.subr.mxu0 0.0
        %484 = vmatpush2.msra.mxu0 0.0
        %485 = vmatprep.subr.mxu0 0.0
        %486 = vmatpush2.msra.mxu0 0.0
        %487 = vmatprep.subr.mxu0 0.0
        %488 = vmatpush2.msra.mxu0 0.0
        %489 = vmatprep.subr.mxu0 0.0
        %490 = vmatpush2.msra.mxu0 0.0
        %491 = vmatprep.subr.mxu0 0.0
        %492 = vmatpush2.msra.mxu0 0.0
        %493 = vmatprep.subr.mxu0 0.0
        %494 = vmatpush2.msra.mxu0 0.0
        %495 = vmatprep.mubr.f32.mxu0 0.0
        %496 = vmatmul.mubr.f32.gmra.mxu0 %v414
        %v497 = vpop.f32.mrf.mxu0
        %v498 = vadd.f32 0.0, %v497
        %v499 = vpop.f32.mrf.mxu0
        %500 = vdwg.mxu0
        %v501 = vadd.f32 %v413, %v498
        %v502 = vmul.f32 %v501, %v297
        %v503 = vxor.u32 %v502, 2147483648
        %v504 = vmul.f32 %v503, 1.442695
        %v505 = vpow.pop %v504
        %v506 = vadd.f32 %v505, 1.0
        %v507 = vrcp.pop %v506
        %v508 = vmul.f32 1.0, %v507
        %v509 = vmul.f32 %v508, %v297
        %v510 = vsub.f32 %v509, %v395
        %511 = vrot.lane.b32.xlu0 %v510, 64
        %v512 = vpop.permute.xlu0 %511
        %513 = vrot.lane.b32.xlu0 %v510, 96
        %v514 = vpop.permute.xlu0 %513
        %515 = vrot.lane.b32.xlu0 %v510, 32
        %v516 = vpop.permute.xlu0 %515
        %v517 = vmul.f32 %v510, %v512
        %v518 = vld [vmem:[#allocation5] sm:$0x3]
        %v519 = vmul.f32 %v514, %v518
        %v520 = vadd.f32 %v517, %v519
        %v521 = vtanh.pop %v520
        %v522 = vmul.f32 %v516, %v521
        %523 = vst [vmem:[#allocation5] sm:$0x3] %v520
        %524 = vst [vmem:[#allocation4] sm:$0x3] %v522
        %525 = vst.msk [vmem:[%s282] sm:$0x3] %vm411, %v522
        %p526 = scmp.lt.s32.totalorder %s18, 7
        %s527 = scalar_select %p526, %s18, 7
        %s528 = smul.addr %s527, 2
        %s529 = scalar_lea.vmem %s4, %s528
        %s530 = ssub.s32 7, %s18
        %p531 = scmp.lt.s32.totalorder %s530, 7
        %s532 = scalar_select %p531, %s530, 7
        %s533 = smul.addr %s532, 2
        %s534 = scalar_lea.vmem %s5, %s533
        // Predicated region
        $region45: #{ner_classifier_crf_forward.6} parent=35 // pred_check
          %p535 = pneg %p132
        $region46: #{ner_classifier_crf_forward.6} parent=35 // pred_check_branch
          %537 = sbr.rel (%p535) target = $region48
        $region47: #{ner_classifier_crf_forward.6} parent=35 // pred_region
          _
        $region48: #{ner_classifier_crf_forward.6} parent=35 // pred_fallthru
          _
        // Predicated region
        $region49: #{ner_classifier_crf_forward.6} parent=35 // pred_check
          %p538 = pneg %p160
        $region50: #{ner_classifier_crf_forward.6} parent=35 // pred_check_branch
          %540 = sbr.rel (%p538) target = $region52
        $region51: #{ner_classifier_crf_forward.6} parent=35 // pred_region
          %s541 = ssub.s32 7, %s18
        $region52: #{ner_classifier_crf_forward.6} parent=35 // pred_fallthru
          _
      $region36: #{ner_classifier_crf_forward.6} parent=5 // pred_fallthru
        _
      %p542 = scmp.le.s32.totalorder 2, %s13
      // Predicated region
      $region53: #{ner_classifier_crf_forward.6} parent=5 // pred_check
        %p543 = pneg %p542
      $region54: #{ner_classifier_crf_forward.6} parent=5 // pred_check_branch
        %545 = sbr.rel (%p543) target = $region56
      $region55: #{ner_classifier_crf_forward.6} parent=5 // pred_region
        %s546 = ssub.s32 %s13, 2
        // Predicated region
        $region57: #{ner_classifier_crf_forward.6} parent=55 // pred_check
          %p547 = pneg %p138
        $region58: #{ner_classifier_crf_forward.6} parent=55 // pred_check_branch
          %549 = sbr.rel (%p547) target = $region60
        $region59: #{ner_classifier_crf_forward.6} parent=55 // pred_region
          %p550 = scmp.lt.s32.totalorder %s19, 7
          %s551 = scalar_select %p550, %s19, 7
          %s552 = smul.addr %s551, 2
          %s553 = scalar_lea.vmem %s4, %s552
        $region60: #{ner_classifier_crf_forward.6} parent=55 // pred_fallthru
          _
        // Predicated region
        $region61: #{ner_classifier_crf_forward.6} parent=55 // pred_check
          %p554 = pneg %p166
        $region62: #{ner_classifier_crf_forward.6} parent=55 // pred_check_branch
          %556 = sbr.rel (%p554) target = $region64
        $region63: #{ner_classifier_crf_forward.6} parent=55 // pred_region
          %s557 = ssub.s32 7, %s19
          %p558 = scmp.lt.s32.totalorder %s557, 7
          %s559 = scalar_select %p558, %s557, 7
          %s560 = smul.addr %s559, 2
          %s561 = scalar_lea.vmem %s5, %s560
        $region64: #{ner_classifier_crf_forward.6} parent=55 // pred_fallthru
          _
      $region56: #{ner_classifier_crf_forward.6} parent=5 // pred_fallthru
        _
    $region6: #{ner_classifier_crf_forward.6} parent=1 // loop_footer
      %s17 = sadd.s32 1, %s13
    $region7: #{ner_classifier_crf_forward.6} parent=1 // loop_footer_branch
      %12 = sbr.rel target = $region3
    $region8: #{ner_classifier_crf_forward.6} parent=1 // loop_exit
      _
    %562 = vsyncpa [#allocation7], 1
    %s563 = scalar_lea.sflag [#allocation7], 1
    %564 = vsyncpa %s563, 1

// kernel: ner_classifier_crf_forward.7
$region0: #{ner_classifier_crf_forward.7}
  #allocation0 [shape = 'u32[]', space=smem, size = 0x4, offset = 0x4, fixed_abs, tag = 'smem constant byte address 0x4 - core index']
  #allocation1 [shape = 'u32[144,128]{1,0:T(1,128)}', space=vmem, size = 0x12000, scoped, tag = 'internal scratch']
  %s0 = inlined_call_operand.vmem [shape: f32[16,64], index: 0, kind: input, shape index: {}]
  %s1 = inlined_call_operand.vmem [shape: bf16[64,256], index: 1, kind: input, shape index: {}]
  %s2 = inlined_call_operand.vmem [shape: f32[1,256], index: 2, kind: input, shape index: {}]
  %s3 = inlined_call_operand.vmem [shape: f32[16,256], index: 3, kind: output, shape index: {}]
  %s4 = sld [smem:[#allocation0]]
  $region22: #{ner_classifier_crf_forward.7} parent=0
    _
  %s6 = ssub.s32 1, %s4
  %s7 = scalar_select 0, %s6, %s4
  // Predicated region
  $region2: #{ner_classifier_crf_forward.7} parent=0 // pred_check
    _
  $region3: #{ner_classifier_crf_forward.7} parent=0 // pred_check_branch
    %9 = sbr.rel (0) target = $region5
  $region4: #{ner_classifier_crf_forward.7} parent=0 // pred_region
    _
  $region5: #{ner_classifier_crf_forward.7} parent=0 // pred_fallthru
    _
  // Predicated region
  $region6: #{ner_classifier_crf_forward.7} parent=0 // pred_check
    _
  $region7: #{ner_classifier_crf_forward.7} parent=0 // pred_check_branch
    %11 = sbr.rel (0) target = $region9
  $region8: #{ner_classifier_crf_forward.7} parent=0 // pred_region
    _
  $region9: #{ner_classifier_crf_forward.7} parent=0 // pred_fallthru
    _
  // Predicated region
  $region10: #{ner_classifier_crf_forward.7} parent=0 // pred_check
    _
  $region11: #{ner_classifier_crf_forward.7} parent=0 // pred_check_branch
    %13 = sbr.rel (0) target = $region13
  $region12: #{ner_classifier_crf_forward.7} parent=0 // pred_region
    _
  $region13: #{ner_classifier_crf_forward.7} parent=0 // pred_fallthru
    _
  %v15 = vld [vmem:[%s0] sm:$0xff]
  %v16 = vld [vmem:[%s0 + $0x8] sm:$0xff]
  %v17 = vpack.c.bf16 %v16, %v15
  %v18 = vld [vmem:[%s1] sm:$0xff]
  %v19 = vld [vmem:[%s1 + $0x8] sm:$0xff]
  %v20 = vld [vmem:[%s1 + $0x10] sm:$0xff]
  %v21 = vld [vmem:[%s1 + $0x18] sm:$0xff]
  %v22 = vld [vmem:[%s1 + $0x20] sm:$0xff]
  %v23 = vld [vmem:[%s1 + $0x28] sm:$0xff]
  %v24 = vld [vmem:[%s1 + $0x30] sm:$0xff]
  %v25 = vld [vmem:[%s1 + $0x38] sm:$0xff]
  %v26 = vld [vmem:[%s2] sm:$0x3]
  %v28 = vlaneseq
  %v29 = vshrl.u32 %v28, 7
  %v30 = vsub.s32 0, %v29
  %v31 = vrot.slane %v26, %v30
  %v32 = vlaneseq
  %v33 = vshrl.u32 %v32, 7
  %v34 = vsub.s32 1, %v33
  %v35 = vrot.slane %v26, %v34
  %v46 = vunpack.c.l.b16 %v18
  %v47 = vunpack.c.h.b16 %v18
  %v48 = vunpack.c.l.b16 %v19
  %v49 = vunpack.c.h.b16 %v19
  %v50 = vunpack.c.l.b16 %v20
  %v51 = vunpack.c.h.b16 %v20
  %v52 = vunpack.c.l.b16 %v21
  %v53 = vunpack.c.h.b16 %v21
  %v54 = vunpack.c.l.b16 %v22
  %v55 = vunpack.c.h.b16 %v22
  %v56 = vunpack.c.l.b16 %v23
  %v57 = vunpack.c.h.b16 %v23
  %v58 = vunpack.c.l.b16 %v24
  %v59 = vunpack.c.h.b16 %v24
  %v60 = vunpack.c.l.b16 %v25
  %v61 = vunpack.c.h.b16 %v25
  %v62 = vpack.c.b16 %v48, %v46
  %v63 = vpack.c.b16 %v49, %v47
  %v64 = vpack.c.b16 %v52, %v50
  %v65 = vpack.c.b16 %v53, %v51
  %v66 = vpack.c.b16 %v56, %v54
  %v67 = vpack.c.b16 %v57, %v55
  %v68 = vpack.c.b16 %v60, %v58
  %v69 = vpack.c.b16 %v61, %v59
  %vm78 = vcmask 523264
  %v80 = vsel %vm78, %v17, 0
  %82 = vmatprep.subr.bf16.mxu0 0
  %83 = vmatpush1.bf16.msra.mxu0 0
  %84 = vmatprep.subr.bf16.mxu0 0
  %85 = vmatpush1.bf16.msra.mxu0 0
  %86 = vmatprep.subr.bf16.mxu0 0
  %87 = vmatpush1.bf16.msra.mxu0 0
  %88 = vmatprep.subr.bf16.mxu0 0
  %89 = vmatpush1.bf16.msra.mxu0 0
  %90 = vmatprep.subr.bf16.mxu0 %v69
  %91 = vmatpush1.bf16.msra.mxu0 %v68
  %92 = vmatprep.subr.bf16.mxu0 %v67
  %93 = vmatpush1.bf16.msra.mxu0 %v66
  %94 = vmatprep.subr.bf16.mxu0 %v65
  %95 = vmatpush1.bf16.msra.mxu0 %v64
  %96 = vmatprep.subr.bf16.mxu0 %v63
  %97 = vmatpush1.bf16.msra.mxu0 %v62
  %98 = vmatprep.subr.bf16.mxu0 0
  %99 = vmatpush2.bf16.msra.mxu0 0
  %100 = vmatprep.subr.bf16.mxu0 0
  %101 = vmatpush2.bf16.msra.mxu0 0
  %102 = vmatprep.subr.bf16.mxu0 0
  %103 = vmatpush2.bf16.msra.mxu0 0
  %104 = vmatprep.subr.bf16.mxu0 0
  %105 = vmatpush2.bf16.msra.mxu0 0
  %106 = vmatprep.subr.bf16.mxu0 0
  %107 = vmatpush2.bf16.msra.mxu0 0
  %108 = vmatprep.subr.bf16.mxu0 0
  %109 = vmatpush2.bf16.msra.mxu0 0
  %110 = vmatprep.subr.bf16.mxu0 0
  %111 = vmatpush2.bf16.msra.mxu0 0
  %112 = vmatprep.subr.bf16.mxu0 0
  %113 = vmatpush2.bf16.msra.mxu0 0
  %114 = vmatprep.mubr.bf16.mxu0 0
  %115 = vmatmul.mubr.bf16.gmra.mxu0 %v80
  %v116 = vpop.f32.mrf.mxu0
  %v117 = vadd.f32 %v31, %v116
  %v118 = vpop.f32.mrf.mxu0
  %v119 = vadd.f32 %v35, %v118
  %v120 = vpop.f32.mrf.mxu0
  %v121 = vadd.f32 %v31, %v120
  %v122 = vpop.f32.mrf.mxu0
  %v123 = vadd.f32 %v35, %v122
  %124 = vdwg.mxu0
  %125 = vst [vmem:[%s3] sm:$0xff] %v117
  %126 = vst [vmem:[%s3 + $0x8] sm:$0xff] %v119
  %127 = vst [vmem:[%s3 + $0x10] sm:$0xff] %v121
  %128 = vst [vmem:[%s3 + $0x18] sm:$0xff] %v123
  // Predicated region
  $region14: #{ner_classifier_crf_forward.7} parent=0 // pred_check
    _
  $region15: #{ner_classifier_crf_forward.7} parent=0 // pred_check_branch
    %130 = sbr.rel (0) target = $region17
  $region16: #{ner_classifier_crf_forward.7} parent=0 // pred_region
    _
  $region17: #{ner_classifier_crf_forward.7} parent=0 // pred_fallthru
    _
  // Predicated region
  $region18: #{ner_classifier_crf_forward.7} parent=0 // pred_check
    _
  $region19: #{ner_classifier_crf_forward.7} parent=0 // pred_check_branch
    %132 = sbr.rel (0) target = $region21
  $region20: #{ner_classifier_crf_forward.7} parent=0 // pred_region
    _
  $region21: #{ner_classifier_crf_forward.7} parent=0 // pred_fallthru
    _

// kernel: custom-call.2
$region0: #{custom-call.2}
  %s0 = inlined_call_operand.vmem [shape: s32[7,2,14], index: 0, kind: output, shape index: {}]

// kernel: custom-call.3
$region0: #{custom-call.3}
  %s0 = inlined_call_operand.vmem [shape: s32[7,2], index: 0, kind: output, shape index: {}]

// kernel: ner_classifier_crf_forward.8
$region0: #{ner_classifier_crf_forward.8}
  #allocation0 [shape = 'u32[]', space=smem, size = 0x4, offset = 0x4, fixed_abs, tag = 'smem constant byte address 0x4 - core index']
  #allocation1 [shape = 'u32[144,128]{1,0:T(1,128)}', space=vmem, size = 0x12000, scoped, tag = 'internal scratch']
  #allocation2 [shape = 'f32[2,128]{1,0:T(2,128)}', space=vmem, size = 0x400, scoped, tag = 'scratch operand']
  #allocation3 [shape = 'f32[2,128]{1,0:T(2,128)}', space=vmem, size = 0x400, scoped, tag = 'scratch operand']
  #allocation4 [shape = 'f32[2,128]{1,0:T(2,128)}', space=vmem, size = 0x400, scoped, tag = 'scratch operand']
  #allocation5 [shape = 'f32[2,128]{1,0:T(2,128)}', space=vmem, size = 0x400, scoped, tag = 'scratch operand']
  %s0 = inlined_call_operand.vmem [shape: f32[8,2,256], index: 0, kind: input, shape index: {}, may-alias: {0,1}]
  %s1 = inlined_call_operand.vmem [shape: f32[8,2,256], index: 1, kind: input, shape index: {}, may-alias: {0,1}]
  %s2 = inlined_call_operand.vmem [shape: f32[128,128], index: 2, kind: input, shape index: {}]
  %s3 = inlined_call_operand.vmem [shape: f32[128,128], index: 3, kind: input, shape index: {}]
  %s4 = inlined_call_operand.vmem [shape: f32[8,2,32], index: 4, kind: output, shape index: {0}]
  %s5 = inlined_call_operand.vmem [shape: f32[8,2,32], index: 5, kind: output, shape index: {1}]
  %6 = xla_tuple %s4, %s5
  %s7 = sld [smem:[#allocation0]]
  $region61: #{ner_classifier_crf_forward.8} parent=0
    _
  %s9 = ssub.s32 1, %s7
  %s10 = scalar_select 0, %s9, %s7
  loop: start=0, step=1, limit=10
  $region2: #{ner_classifier_crf_forward.8} parent=0 // loop_pre_header
    _
  $region3: #{ner_classifier_crf_forward.8} parent=0 // loop_header
    %s12 = sphi 0, %s16
    %p13 = scmp.ge.s32.totalorder %s12, 10
    %s22 = sphi 0, %s24
    %s25 = sphi 0, %s22
    %s26 = sphi 0, %s25
    %s42 = sphi 0, %s26
    %s50 = sphi 0, %s52
    %s53 = sphi 0, %s50
    %s54 = sphi 0, %s53
    %s70 = sphi 0, %s54
    %s74 = sphi 0, %s74
    %s76 = sphi 0, %s74
    %s77 = sphi 0, %s76
    %s91 = sphi 0, %s77
    %s95 = sphi 0, %s95
    %s97 = sphi 0, %s95
    %s98 = sphi 0, %s97
    %s112 = sphi 0, %s98
    %s118 = sphi 0, %s120
    %s121 = sphi 0, %s118
    %s122 = sphi 0, %s121
    %s138 = sphi 0, %s122
    %s146 = sphi 0, %s148
    %s149 = sphi 0, %s146
    %s150 = sphi 0, %s149
    %s166 = sphi 0, %s150
  $region4: #{ner_classifier_crf_forward.8} parent=0 // loop_header_branch
    %15 = sbr.rel (%p13) target = $region8
  $region5: #{ner_classifier_crf_forward.8} parent=0 // loop_body
    %s17 = ssub.s32 %s12, 1
    %s18 = ssub.s32 %s12, 2
    %s19 = sadd.s32 %s12, 1
    %s20 = ssub.s32 %s12, %s19
    %p21 = scmp.eq.s32.totalorder %s20, 0
    %s23 = sadd.s32 %s22, 1
    %s24 = scalar_select %p21, %s22, %s23
    %p27 = pneg %p21
    %p28 = scmp.eq.s32.totalorder %s12, 7
    %p29 = por %p27, %p28
    %p30 = scmp.ne.s32.totalorder %s22, %s25
    %p31 = scmp.eq.s32.totalorder %s12, 0
    %p32 = por %p30, %p31
    %p33 = scmp.ne.s32.totalorder %s22, %s25
    %p34 = scmp.eq.s32.totalorder %s17, 7
    %p35 = por %p33, %p34
    %p36 = scmp.ne.s32.totalorder %s25, %s26
    %p37 = scmp.eq.s32.totalorder %s17, 0
    %p38 = por %p36, %p37
    %p39 = scmp.ne.s32.totalorder %s25, %s26
    %p40 = scmp.eq.s32.totalorder %s18, 7
    %p41 = por %p39, %p40
    %p43 = scmp.ne.s32.totalorder %s26, %s42
    %p44 = scmp.eq.s32.totalorder %s18, 0
    %p45 = por %p43, %p44
    %s46 = ssub.s32 7, %s12
    %s47 = ssub.s32 7, %s19
    %s48 = ssub.s32 %s46, %s47
    %p49 = scmp.eq.s32.totalorder %s48, 0
    %s51 = sadd.s32 %s50, 1
    %s52 = scalar_select %p49, %s50, %s51
    %p55 = pneg %p49
    %p56 = scmp.eq.s32.totalorder %s12, 7
    %p57 = por %p55, %p56
    %p58 = scmp.ne.s32.totalorder %s50, %s53
    %p59 = scmp.eq.s32.totalorder %s12, 0
    %p60 = por %p58, %p59
    %p61 = scmp.ne.s32.totalorder %s50, %s53
    %p62 = scmp.eq.s32.totalorder %s17, 7
    %p63 = por %p61, %p62
    %p64 = scmp.ne.s32.totalorder %s53, %s54
    %p65 = scmp.eq.s32.totalorder %s17, 0
    %p66 = por %p64, %p65
    %p67 = scmp.ne.s32.totalorder %s53, %s54
    %p68 = scmp.eq.s32.totalorder %s18, 7
    %p69 = por %p67, %p68
    %p71 = scmp.ne.s32.totalorder %s54, %s70
    %p72 = scmp.eq.s32.totalorder %s18, 0
    %p73 = por %p71, %p72
    %s75 = sadd.s32 %s74, 1
    %p78 = scmp.eq.s32.totalorder %s12, 7
    %p79 = scmp.ne.s32.totalorder %s74, %s76
    %p80 = scmp.eq.s32.totalorder %s12, 0
    %p81 = por %p79, %p80
    %p82 = scmp.ne.s32.totalorder %s74, %s76
    %p83 = scmp.eq.s32.totalorder %s17, 7
    %p84 = por %p82, %p83
    %p85 = scmp.ne.s32.totalorder %s76, %s77
    %p86 = scmp.eq.s32.totalorder %s17, 0
    %p87 = por %p85, %p86
    %p88 = scmp.ne.s32.totalorder %s76, %s77
    %p89 = scmp.eq.s32.totalorder %s18, 7
    %p90 = por %p88, %p89
    %p92 = scmp.ne.s32.totalorder %s77, %s91
    %p93 = scmp.eq.s32.totalorder %s18, 0
    %p94 = por %p92, %p93
    %s96 = sadd.s32 %s95, 1
    %p99 = scmp.eq.s32.totalorder %s12, 7
    %p100 = scmp.ne.s32.totalorder %s95, %s97
    %p101 = scmp.eq.s32.totalorder %s12, 0
    %p102 = por %p100, %p101
    %p103 = scmp.ne.s32.totalorder %s95, %s97
    %p104 = scmp.eq.s32.totalorder %s17, 7
    %p105 = por %p103, %p104
    %p106 = scmp.ne.s32.totalorder %s97, %s98
    %p107 = scmp.eq.s32.totalorder %s17, 0
    %p108 = por %p106, %p107
    %p109 = scmp.ne.s32.totalorder %s97, %s98
    %p110 = scmp.eq.s32.totalorder %s18, 7
    %p111 = por %p109, %p110
    %p113 = scmp.ne.s32.totalorder %s98, %s112
    %p114 = scmp.eq.s32.totalorder %s18, 0
    %p115 = por %p113, %p114
    %s116 = ssub.s32 %s12, %s19
    %p117 = scmp.eq.s32.totalorder %s116, 0
    %s119 = sadd.s32 %s118, 1
    %s120 = scalar_select %p117, %s118, %s119
    %p123 = pneg %p117
    %p124 = scmp.eq.s32.totalorder %s12, 7
    %p125 = por %p123, %p124
    %p126 = scmp.ne.s32.totalorder %s118, %s121
    %p127 = scmp.eq.s32.totalorder %s12, 0
    %p128 = por %p126, %p127
    %p129 = scmp.ne.s32.totalorder %s118, %s121
    %p130 = scmp.eq.s32.totalorder %s17, 7
    %p131 = por %p129, %p130
    %p132 = scmp.ne.s32.totalorder %s121, %s122
    %p133 = scmp.eq.s32.totalorder %s17, 0
    %p134 = por %p132, %p133
    %p135 = scmp.ne.s32.totalorder %s121, %s122
    %p136 = scmp.eq.s32.totalorder %s18, 7
    %p137 = por %p135, %p136
    %p139 = scmp.ne.s32.totalorder %s122, %s138
    %p140 = scmp.eq.s32.totalorder %s18, 0
    %p141 = por %p139, %p140
    %s142 = ssub.s32 7, %s12
    %s143 = ssub.s32 7, %s19
    %s144 = ssub.s32 %s142, %s143
    %p145 = scmp.eq.s32.totalorder %s144, 0
    %s147 = sadd.s32 %s146, 1
    %s148 = scalar_select %p145, %s146, %s147
    %p151 = pneg %p145
    %p152 = scmp.eq.s32.totalorder %s12, 7
    %p153 = por %p151, %p152
    %p154 = scmp.ne.s32.totalorder %s146, %s149
    %p155 = scmp.eq.s32.totalorder %s12, 0
    %p156 = por %p154, %p155
    %p157 = scmp.ne.s32.totalorder %s146, %s149
    %p158 = scmp.eq.s32.totalorder %s17, 7
    %p159 = por %p157, %p158
    %p160 = scmp.ne.s32.totalorder %s149, %s150
    %p161 = scmp.eq.s32.totalorder %s17, 0
    %p162 = por %p160, %p161
    %p163 = scmp.ne.s32.totalorder %s149, %s150
    %p164 = scmp.eq.s32.totalorder %s18, 7
    %p165 = por %p163, %p164
    %p167 = scmp.ne.s32.totalorder %s150, %s166
    %p168 = scmp.eq.s32.totalorder %s18, 0
    %p169 = por %p167, %p168
    %p170 = scmp.le.s32.totalorder 1, %s12
    %p171 = scmp.lt.s32.totalorder %s12, 9
    %p172 = pnand %p170, %p171
    %p173 = pneg %p172
    // Predicated region
    $region9: #{ner_classifier_crf_forward.8} parent=5 // pred_check
      _
    $region10: #{ner_classifier_crf_forward.8} parent=5 // pred_check_branch
      %175 = sbr.rel (%p172) target = $region12
    $region11: #{ner_classifier_crf_forward.8} parent=5 // pred_region
      %s176 = ssub.s32 %s12, 1
      // Predicated region
      $region13: #{ner_classifier_crf_forward.8} parent=11 // pred_check
        %p177 = pneg %p87
      $region14: #{ner_classifier_crf_forward.8} parent=11 // pred_check_branch
        %179 = sbr.rel (%p177) target = $region16
      $region15: #{ner_classifier_crf_forward.8} parent=11 // pred_region
        _
      $region16: #{ner_classifier_crf_forward.8} parent=11 // pred_fallthru
        _
      // Predicated region
      $region17: #{ner_classifier_crf_forward.8} parent=11 // pred_check
        %p180 = pneg %p108
      $region18: #{ner_classifier_crf_forward.8} parent=11 // pred_check_branch
        %182 = sbr.rel (%p180) target = $region20
      $region19: #{ner_classifier_crf_forward.8} parent=11 // pred_region
        _
      $region20: #{ner_classifier_crf_forward.8} parent=11 // pred_fallthru
        _
    $region12: #{ner_classifier_crf_forward.8} parent=5 // pred_fallthru
      _
    %p183 = scmp.lt.s32.totalorder %s12, 8
    // Predicated region
    $region21: #{ner_classifier_crf_forward.8} parent=5 // pred_check
      %p184 = pneg %p183
    $region22: #{ner_classifier_crf_forward.8} parent=5 // pred_check_branch
      %186 = sbr.rel (%p184) target = $region24
    $region23: #{ner_classifier_crf_forward.8} parent=5 // pred_region
      // Predicated region
      $region25: #{ner_classifier_crf_forward.8} parent=23 // pred_check
        %p187 = pneg %p32
      $region26: #{ner_classifier_crf_forward.8} parent=23 // pred_check_branch
        %189 = sbr.rel (%p187) target = $region28
      $region27: #{ner_classifier_crf_forward.8} parent=23 // pred_region
        %p190 = scmp.lt.s32.totalorder %s12, 7
        %s191 = scalar_select %p190, %s12, 7
        %s192 = smul.addr %s191, 2
        %s193 = smul.addr %s192, 2
        %s194 = scalar_lea.vmem %s0, %s193
      $region28: #{ner_classifier_crf_forward.8} parent=23 // pred_fallthru
        _
      // Predicated region
      $region29: #{ner_classifier_crf_forward.8} parent=23 // pred_check
        %p195 = pneg %p60
      $region30: #{ner_classifier_crf_forward.8} parent=23 // pred_check_branch
        %197 = sbr.rel (%p195) target = $region32
      $region31: #{ner_classifier_crf_forward.8} parent=23 // pred_region
        %s198 = ssub.s32 7, %s12
        %p199 = scmp.lt.s32.totalorder %s198, 7
        %s200 = scalar_select %p199, %s198, 7
        %s201 = smul.addr %s200, 2
        %s202 = sadd.s32 1, %s201
        %s203 = smul.addr %s202, 2
        %s204 = scalar_lea.vmem %s1, %s203
        %s205 = ssub.s32 7, %s12
      $region32: #{ner_classifier_crf_forward.8} parent=23 // pred_fallthru
        _
    $region24: #{ner_classifier_crf_forward.8} parent=5 // pred_fallthru
      _
    %p206 = scmp.le.s32.totalorder 1, %s12
    %p207 = scmp.lt.s32.totalorder %s12, 9
    %p208 = pnand %p206, %p207
    %p209 = pneg %p208
    // Predicated region
    $region33: #{ner_classifier_crf_forward.8} parent=5 // pred_check
      _
    $region34: #{ner_classifier_crf_forward.8} parent=5 // pred_check_branch
      %211 = sbr.rel (%p208) target = $region36
    $region35: #{ner_classifier_crf_forward.8} parent=5 // pred_region
      %s212 = ssub.s32 %s12, 1
      %p213 = scmp.lt.s32.totalorder %s17, 7
      %s214 = scalar_select %p213, %s17, 7
      %s215 = smul.addr %s214, 2
      %s216 = smul.addr %s215, 2
      %s217 = scalar_lea.vmem %s0, %s216
      %p218 = pneg %p38
      %p219 = pneg %p35
      %s220 = ssub.s32 7, %s17
      %p221 = scmp.lt.s32.totalorder %s220, 7
      %s222 = scalar_select %p221, %s220, 7
      %s223 = smul.addr %s222, 2
      %s224 = sadd.s32 1, %s223
      %s225 = smul.addr %s224, 2
      %s226 = scalar_lea.vmem %s1, %s225
      %p227 = pneg %p66
      %p228 = pneg %p63
      %p229 = pneg %p87
      %p230 = pneg %p84
      %p231 = pneg %p108
      %p232 = pneg %p105
      %p233 = pneg %p134
      %p234 = pneg %p131
      %p235 = scmp.lt.s32.totalorder %s17, 7
      %s236 = scalar_select %p235, %s17, 7
      %s237 = smul.addr %s236, 2
      %s238 = scalar_lea.vmem %s4, %s237
      %p239 = pneg %p162
      %p240 = pneg %p159
      %s241 = ssub.s32 7, %s17
      %p242 = scmp.lt.s32.totalorder %s241, 7
      %s243 = scalar_select %p242, %s241, 7
      %s244 = smul.addr %s243, 2
      %s245 = scalar_lea.vmem %s5, %s244
      %p246 = scmp.lt.s32.totalorder %s17, 7
      %s247 = scalar_select %p246, %s17, 7
      %s248 = smul.addr %s247, 2
      %s249 = smul.addr %s248, 2
      %s250 = scalar_lea.vmem %s0, %s249
      %s251 = ssub.s32 7, %s17
      %p252 = scmp.lt.s32.totalorder %s251, 7
      %s253 = scalar_select %p252, %s251, 7
      %s254 = smul.addr %s253, 2
      %s255 = sadd.s32 1, %s254
      %s256 = smul.addr %s255, 2
      %s257 = scalar_lea.vmem %s1, %s256
      %s258 = ssub.s32 7, %s17
      %p259 = scmp.lt.s32.totalorder %s17, 7
      %s260 = scalar_select %p259, %s17, 7
      %s261 = smul.addr %s260, 2
      %s262 = scalar_lea.vmem %s4, %s261
      %s263 = ssub.s32 7, %s17
      %p264 = scmp.lt.s32.totalorder %s263, 7
      %s265 = scalar_select %p264, %s263, 7
      %s266 = smul.addr %s265, 2
      %s267 = scalar_lea.vmem %s5, %s266
      %s268 = ssub.s32 7, %s17
      %p269 = scmp.eq.s32.totalorder %s17, 0
      // Predicated region
      $region37: #{ner_classifier_crf_forward.8} parent=35 // pred_check
        %p270 = pneg %p269
      $region38: #{ner_classifier_crf_forward.8} parent=35 // pred_check_branch
        %272 = sbr.rel (%p270) target = $region40
      $region39: #{ner_classifier_crf_forward.8} parent=35 // pred_region
        %273 = vst [vmem:[#allocation2] sm:$0x3] 0.0
        %274 = vst [vmem:[#allocation3] sm:$0x3] 0.0
        %275 = vst [vmem:[#allocation4] sm:$0x3] 0.0
        %276 = vst [vmem:[#allocation5] sm:$0x3] 0.0
      $region40: #{ner_classifier_crf_forward.8} parent=35 // pred_fallthru
        _
      %v277 = vlaneseq
      %v278 = vand.u32 %v277, 127
      %vm279 = vcmp.ge.s32.totalorder %v278, 64
      %vm280 = vcmp.lt.s32.totalorder %v278, 96
      %vm281 = vmand %vm279, %vm280
      %v282 = vsel %vm281, 2.0, 1.0
      %v283 = vld [vmem:[%s250] sm:$0x3]
      %v284 = vld [vmem:[#allocation2] sm:$0x3]
      %v285 = vld [vmem:[%s2] sm:$0xff]
      %v286 = vld [vmem:[%s2 + $0x8] sm:$0xff]
      %v287 = vld [vmem:[%s2 + $0x10] sm:$0xff]
      %v288 = vld [vmem:[%s2 + $0x18] sm:$0xff]
      %v289 = vld [vmem:[%s2 + $0x20] sm:$0xff]
      %v290 = vld [vmem:[%s2 + $0x28] sm:$0xff]
      %v291 = vld [vmem:[%s2 + $0x30] sm:$0xff]
      %v292 = vld [vmem:[%s2 + $0x38] sm:$0xff]
      %v293 = vld [vmem:[%s2 + $0x40] sm:$0xff]
      %v294 = vld [vmem:[%s2 + $0x48] sm:$0xff]
      %v295 = vld [vmem:[%s2 + $0x50] sm:$0xff]
      %v296 = vld [vmem:[%s2 + $0x58] sm:$0xff]
      %v297 = vld [vmem:[%s2 + $0x60] sm:$0xff]
      %v298 = vld [vmem:[%s2 + $0x68] sm:$0xff]
      %v299 = vld [vmem:[%s2 + $0x70] sm:$0xff]
      %v300 = vld [vmem:[%s2 + $0x78] sm:$0xff]
      %301 = vmatprep.subr.mxu0 0.0
      %302 = vmatpush1.msra.mxu0 %v300
      %303 = vmatprep.subr.mxu0 0.0
      %304 = vmatpush1.msra.mxu0 %v299
      %305 = vmatprep.subr.mxu0 0.0
      %306 = vmatpush1.msra.mxu0 %v298
      %307 = vmatprep.subr.mxu0 0.0
      %308 = vmatpush1.msra.mxu0 %v297
      %309 = vmatprep.subr.mxu0 0.0
      %310 = vmatpush1.msra.mxu0 %v296
      %311 = vmatprep.subr.mxu0 0.0
      %312 = vmatpush1.msra.mxu0 %v295
      %313 = vmatprep.subr.mxu0 0.0
      %314 = vmatpush1.msra.mxu0 %v294
      %315 = vmatprep.subr.mxu0 0.0
      %316 = vmatpush1.msra.mxu0 %v293
      %317 = vmatprep.subr.mxu0 0.0
      %318 = vmatpush1.msra.mxu0 %v292
      %319 = vmatprep.subr.mxu0 0.0
      %320 = vmatpush1.msra.mxu0 %v291
      %321 = vmatprep.subr.mxu0 0.0
      %322 = vmatpush1.msra.mxu0 %v290
      %323 = vmatprep.subr.mxu0 0.0
      %324 = vmatpush1.msra.mxu0 %v289
      %325 = vmatprep.subr.mxu0 0.0
      %326 = vmatpush1.msra.mxu0 %v288
      %327 = vmatprep.subr.mxu0 0.0
      %328 = vmatpush1.msra.mxu0 %v287
      %329 = vmatprep.subr.mxu0 0.0
      %330 = vmatpush1.msra.mxu0 %v286
      %331 = vmatprep.subr.mxu0 0.0
      %332 = vmatpush1.msra.mxu0 %v285
      %333 = vmatprep.subr.mxu0 0.0
      %334 = vmatpush2.msra.mxu0 0.0
      %335 = vmatprep.subr.mxu0 0.0
      %336 = vmatpush2.msra.mxu0 0.0
      %337 = vmatprep.subr.mxu0 0.0
      %338 = vmatpush2.msra.mxu0 0.0
      %339 = vmatprep.subr.mxu0 0.0
      %340 = vmatpush2.msra.mxu0 0.0
      %341 = vmatprep.subr.mxu0 0.0
      %342 = vmatpush2.msra.mxu0 0.0
      %343 = vmatprep.subr.mxu0 0.0
      %344 = vmatpush2.msra.mxu0 0.0
      %345 = vmatprep.subr.mxu0 0.0
      %346 = vmatpush2.msra.mxu0 0.0
      %347 = vmatprep.subr.mxu0 0.0
      %348 = vmatpush2.msra.mxu0 0.0
      %349 = vmatprep.subr.mxu0 0.0
      %350 = vmatpush2.msra.mxu0 0.0
      %351 = vmatprep.subr.mxu0 0.0
      %352 = vmatpush2.msra.mxu0 0.0
      %353 = vmatprep.subr.mxu0 0.0
      %354 = vmatpush2.msra.mxu0 0.0
      %355 = vmatprep.subr.mxu0 0.0
      %356 = vmatpush2.msra.mxu0 0.0
      %357 = vmatprep.subr.mxu0 0.0
      %358 = vmatpush2.msra.mxu0 0.0
      %359 = vmatprep.subr.mxu0 0.0
      %360 = vmatpush2.msra.mxu0 0.0
      %361 = vmatprep.subr.mxu0 0.0
      %362 = vmatpush2.msra.mxu0 0.0
      %363 = vmatprep.subr.mxu0 0.0
      %364 = vmatpush2.msra.mxu0 0.0
      %365 = vmatprep.mubr.f32.mxu0 0.0
      %366 = vmatmul.mubr.f32.gmra.mxu0 %v284
      %v367 = vpop.f32.mrf.mxu0
      %v368 = vadd.f32 0.0, %v367
      %v369 = vpop.f32.mrf.mxu0
      %370 = vdwg.mxu0
      %v371 = vadd.f32 %v283, %v368
      %v372 = vmul.f32 %v371, %v282
      %v373 = vxor.u32 %v372, 2147483648
      %v374 = vmul.f32 %v373, 1.442695
      %v375 = vpow.pop %v374
      %v376 = vadd.f32 %v375, 1.0
      %v377 = vrcp.pop %v376
      %v378 = vmul.f32 1.0, %v377
      %v379 = vmul.f32 %v378, %v282
      %v380 = vsub.f32 %v282, 1.0
      %v381 = vsub.f32 %v379, %v380
      %382 = vrot.lane.b32.xlu0 %v381, 64
      %v383 = vpop.permute.xlu0 %382
      %384 = vrot.lane.b32.xlu0 %v381, 96
      %v385 = vpop.permute.xlu0 %384
      %386 = vrot.lane.b32.xlu0 %v381, 32
      %v387 = vpop.permute.xlu0 %386
      %v388 = vmul.f32 %v381, %v383
      %v389 = vld [vmem:[#allocation3] sm:$0x3]
      %v390 = vmul.f32 %v385, %v389
      %v391 = vadd.f32 %v388, %v390
      %v392 = vtanh.pop %v391
      %v393 = vmul.f32 %v387, %v392
      %394 = vst [vmem:[#allocation3] sm:$0x3] %v391
      %395 = vst [vmem:[#allocation2] sm:$0x3] %v393
      %vm396 = vcmask 254976
      %397 = vst.msk [vmem:[%s262] sm:$0x3] %vm396, %v393
      %v398 = vld [vmem:[%s257] sm:$0x3]
      %v399 = vld [vmem:[#allocation4] sm:$0x3]
      %v400 = vld [vmem:[%s3] sm:$0xff]
      %v401 = vld [vmem:[%s3 + $0x8] sm:$0xff]
      %v402 = vld [vmem:[%s3 + $0x10] sm:$0xff]
      %v403 = vld [vmem:[%s3 + $0x18] sm:$0xff]
      %v404 = vld [vmem:[%s3 + $0x20] sm:$0xff]
      %v405 = vld [vmem:[%s3 + $0x28] sm:$0xff]
      %v406 = vld [vmem:[%s3 + $0x30] sm:$0xff]
      %v407 = vld [vmem:[%s3 + $0x38] sm:$0xff]
      %v408 = vld [vmem:[%s3 + $0x40] sm:$0xff]
      %v409 = vld [vmem:[%s3 + $0x48] sm:$0xff]
      %v410 = vld [vmem:[%s3 + $0x50] sm:$0xff]
      %v411 = vld [vmem:[%s3 + $0x58] sm:$0xff]
      %v412 = vld [vmem:[%s3 + $0x60] sm:$0xff]
      %v413 = vld [vmem:[%s3 + $0x68] sm:$0xff]
      %v414 = vld [vmem:[%s3 + $0x70] sm:$0xff]
      %v415 = vld [vmem:[%s3 + $0x78] sm:$0xff]
      %416 = vmatprep.subr.mxu0 0.0
      %417 = vmatpush1.msra.mxu0 %v415
      %418 = vmatprep.subr.mxu0 0.0
      %419 = vmatpush1.msra.mxu0 %v414
      %420 = vmatprep.subr.mxu0 0.0
      %421 = vmatpush1.msra.mxu0 %v413
      %422 = vmatprep.subr.mxu0 0.0
      %423 = vmatpush1.msra.mxu0 %v412
      %424 = vmatprep.subr.mxu0 0.0
      %425 = vmatpush1.msra.mxu0 %v411
      %426 = vmatprep.subr.mxu0 0.0
      %427 = vmatpush1.msra.mxu0 %v410
      %428 = vmatprep.subr.mxu0 0.0
      %429 = vmatpush1.msra.mxu0 %v409
      %430 = vmatprep.subr.mxu0 0.0
      %431 = vmatpush1.msra.mxu0 %v408
      %432 = vmatprep.subr.mxu0 0.0
      %433 = vmatpush1.msra.mxu0 %v407
      %434 = vmatprep.subr.mxu0 0.0
      %435 = vmatpush1.msra.mxu0 %v406
      %436 = vmatprep.subr.mxu0 0.0
      %437 = vmatpush1.msra.mxu0 %v405
      %438 = vmatprep.subr.mxu0 0.0
      %439 = vmatpush1.msra.mxu0 %v404
      %440 = vmatprep.subr.mxu0 0.0
      %441 = vmatpush1.msra.mxu0 %v403
      %442 = vmatprep.subr.mxu0 0.0
      %443 = vmatpush1.msra.mxu0 %v402
      %444 = vmatprep.subr.mxu0 0.0
      %445 = vmatpush1.msra.mxu0 %v401
      %446 = vmatprep.subr.mxu0 0.0
      %447 = vmatpush1.msra.mxu0 %v400
      %448 = vmatprep.subr.mxu0 0.0
      %449 = vmatpush2.msra.mxu0 0.0
      %450 = vmatprep.subr.mxu0 0.0
      %451 = vmatpush2.msra.mxu0 0.0
      %452 = vmatprep.subr.mxu0 0.0
      %453 = vmatpush2.msra.mxu0 0.0
      %454 = vmatprep.subr.mxu0 0.0
      %455 = vmatpush2.msra.mxu0 0.0
      %456 = vmatprep.subr.mxu0 0.0
      %457 = vmatpush2.msra.mxu0 0.0
      %458 = vmatprep.subr.mxu0 0.0
      %459 = vmatpush2.msra.mxu0 0.0
      %460 = vmatprep.subr.mxu0 0.0
      %461 = vmatpush2.msra.mxu0 0.0
      %462 = vmatprep.subr.mxu0 0.0
      %463 = vmatpush2.msra.mxu0 0.0
      %464 = vmatprep.subr.mxu0 0.0
      %465 = vmatpush2.msra.mxu0 0.0
      %466 = vmatprep.subr.mxu0 0.0
      %467 = vmatpush2.msra.mxu0 0.0
      %468 = vmatprep.subr.mxu0 0.0
      %469 = vmatpush2.msra.mxu0 0.0
      %470 = vmatprep.subr.mxu0 0.0
      %471 = vmatpush2.msra.mxu0 0.0
      %472 = vmatprep.subr.mxu0 0.0
      %473 = vmatpush2.msra.mxu0 0.0
      %474 = vmatprep.subr.mxu0 0.0
      %475 = vmatpush2.msra.mxu0 0.0
      %476 = vmatprep.subr.mxu0 0.0
      %477 = vmatpush2.msra.mxu0 0.0
      %478 = vmatprep.subr.mxu0 0.0
      %479 = vmatpush2.msra.mxu0 0.0
      %480 = vmatprep.mubr.f32.mxu0 0.0
      %481 = vmatmul.mubr.f32.gmra.mxu0 %v399
      %v482 = vpop.f32.mrf.mxu0
      %v483 = vadd.f32 0.0, %v482
      %v484 = vpop.f32.mrf.mxu0
      %485 = vdwg.mxu0
      %v486 = vadd.f32 %v398, %v483
      %v487 = vmul.f32 %v486, %v282
      %v488 = vxor.u32 %v487, 2147483648
      %v489 = vmul.f32 %v488, 1.442695
      %v490 = vpow.pop %v489
      %v491 = vadd.f32 %v490, 1.0
      %v492 = vrcp.pop %v491
      %v493 = vmul.f32 1.0, %v492
      %v494 = vmul.f32 %v493, %v282
      %v495 = vsub.f32 %v494, %v380
      %496 = vrot.lane.b32.xlu0 %v495, 64
      %v497 = vpop.permute.xlu0 %496
      %498 = vrot.lane.b32.xlu0 %v495, 96
      %v499 = vpop.permute.xlu0 %498
      %500 = vrot.lane.b32.xlu0 %v495, 32
      %v501 = vpop.permute.xlu0 %500
      %v502 = vmul.f32 %v495, %v497
      %v503 = vld [vmem:[#allocation5] sm:$0x3]
      %v504 = vmul.f32 %v499, %v503
      %v505 = vadd.f32 %v502, %v504
      %v506 = vtanh.pop %v505
      %v507 = vmul.f32 %v501, %v506
      %508 = vst [vmem:[#allocation5] sm:$0x3] %v505
      %509 = vst [vmem:[#allocation4] sm:$0x3] %v507
      %510 = vst.msk [vmem:[%s267] sm:$0x3] %vm396, %v507
      %p511 = scmp.lt.s32.totalorder %s17, 7
      %s512 = scalar_select %p511, %s17, 7
      %s513 = smul.addr %s512, 2
      %s514 = scalar_lea.vmem %s4, %s513
      %s515 = ssub.s32 7, %s17
      %p516 = scmp.lt.s32.totalorder %s515, 7
      %s517 = scalar_select %p516, %s515, 7
      %s518 = smul.addr %s517, 2
      %s519 = scalar_lea.vmem %s5, %s518
      // Predicated region
      $region41: #{ner_classifier_crf_forward.8} parent=35 // pred_check
        %p520 = pneg %p131
      $region42: #{ner_classifier_crf_forward.8} parent=35 // pred_check_branch
        %522 = sbr.rel (%p520) target = $region44
      $region43: #{ner_classifier_crf_forward.8} parent=35 // pred_region
        _
      $region44: #{ner_classifier_crf_forward.8} parent=35 // pred_fallthru
        _
      // Predicated region
      $region45: #{ner_classifier_crf_forward.8} parent=35 // pred_check
        %p523 = pneg %p159
      $region46: #{ner_classifier_crf_forward.8} parent=35 // pred_check_branch
        %525 = sbr.rel (%p523) target = $region48
      $region47: #{ner_classifier_crf_forward.8} parent=35 // pred_region
        %s526 = ssub.s32 7, %s17
      $region48: #{ner_classifier_crf_forward.8} parent=35 // pred_fallthru
        _
    $region36: #{ner_classifier_crf_forward.8} parent=5 // pred_fallthru
      _
    %p527 = scmp.le.s32.totalorder 2, %s12
    // Predicated region
    $region49: #{ner_classifier_crf_forward.8} parent=5 // pred_check
      %p528 = pneg %p527
    $region50: #{ner_classifier_crf_forward.8} parent=5 // pred_check_branch
      %530 = sbr.rel (%p528) target = $region52
    $region51: #{ner_classifier_crf_forward.8} parent=5 // pred_region
      %s531 = ssub.s32 %s12, 2
      // Predicated region
      $region53: #{ner_classifier_crf_forward.8} parent=51 // pred_check
        %p532 = pneg %p137
      $region54: #{ner_classifier_crf_forward.8} parent=51 // pred_check_branch
        %534 = sbr.rel (%p532) target = $region56
      $region55: #{ner_classifier_crf_forward.8} parent=51 // pred_region
        %p535 = scmp.lt.s32.totalorder %s18, 7
        %s536 = scalar_select %p535, %s18, 7
        %s537 = smul.addr %s536, 2
        %s538 = scalar_lea.vmem %s4, %s537
      $region56: #{ner_classifier_crf_forward.8} parent=51 // pred_fallthru
        _
      // Predicated region
      $region57: #{ner_classifier_crf_forward.8} parent=51 // pred_check
        %p539 = pneg %p165
      $region58: #{ner_classifier_crf_forward.8} parent=51 // pred_check_branch
        %541 = sbr.rel (%p539) target = $region60
      $region59: #{ner_classifier_crf_forward.8} parent=51 // pred_region
        %s542 = ssub.s32 7, %s18
        %p543 = scmp.lt.s32.totalorder %s542, 7
        %s544 = scalar_select %p543, %s542, 7
        %s545 = smul.addr %s544, 2
        %s546 = scalar_lea.vmem %s5, %s545
      $region60: #{ner_classifier_crf_forward.8} parent=51 // pred_fallthru
        _
    $region52: #{ner_classifier_crf_forward.8} parent=5 // pred_fallthru
      _
  $region6: #{ner_classifier_crf_forward.8} parent=0 // loop_footer
    %s16 = sadd.s32 1, %s12
  $region7: #{ner_classifier_crf_forward.8} parent=0 // loop_footer_branch
    %11 = sbr.rel target = $region3
  $region8: #{ner_classifier_crf_forward.8} parent=0 // loop_exit
    _

// kernel: ner_classifier_crf_forward.9
$region0: #{ner_classifier_crf_forward.9}
  #allocation0 [shape = 'u32[]', space=smem, size = 0x4, offset = 0x4, fixed_abs, tag = 'smem constant byte address 0x4 - core index']
  #allocation1 [shape = 'u32[144,128]{1,0:T(1,128)}', space=vmem, size = 0x12000, scoped, tag = 'internal scratch']
  %s0 = inlined_call_operand.vmem [shape: f32[16,64], index: 0, kind: input, shape index: {}]
  %s1 = inlined_call_operand.vmem [shape: bf16[64,128], index: 1, kind: input, shape index: {}]
  %s2 = inlined_call_operand.vmem [shape: f32[1,128], index: 2, kind: input, shape index: {}]
  %s3 = inlined_call_operand.vmem [shape: bf16[128,128], index: 3, kind: input, shape index: {}]
  %s4 = inlined_call_operand.vmem [shape: f32[1,128], index: 4, kind: input, shape index: {}]
  %s5 = inlined_call_operand.vmem [shape: bf16[128,128], index: 5, kind: input, shape index: {}]
  %s6 = inlined_call_operand.vmem [shape: f32[1,128], index: 6, kind: input, shape index: {}]
  %s7 = inlined_call_operand.vmem [shape: bf16[128,128], index: 7, kind: input, shape index: {}]
  %s8 = inlined_call_operand.vmem [shape: f32[1,128], index: 8, kind: input, shape index: {}]
  %s9 = inlined_call_operand.vmem [shape: f32[16,128], index: 9, kind: output, shape index: {}]
  %s10 = sld [smem:[#allocation0]]
  $region46: #{ner_classifier_crf_forward.9} parent=0
    _
  %s12 = ssub.s32 1, %s10
  %s13 = scalar_select 0, %s12, %s10
  // Predicated region
  $region2: #{ner_classifier_crf_forward.9} parent=0 // pred_check
    _
  $region3: #{ner_classifier_crf_forward.9} parent=0 // pred_check_branch
    %15 = sbr.rel (0) target = $region5
  $region4: #{ner_classifier_crf_forward.9} parent=0 // pred_region
    _
  $region5: #{ner_classifier_crf_forward.9} parent=0 // pred_fallthru
    _
  // Predicated region
  $region6: #{ner_classifier_crf_forward.9} parent=0 // pred_check
    _
  $region7: #{ner_classifier_crf_forward.9} parent=0 // pred_check_branch
    %17 = sbr.rel (0) target = $region9
  $region8: #{ner_classifier_crf_forward.9} parent=0 // pred_region
    _
  $region9: #{ner_classifier_crf_forward.9} parent=0 // pred_fallthru
    _
  // Predicated region
  $region10: #{ner_classifier_crf_forward.9} parent=0 // pred_check
    _
  $region11: #{ner_classifier_crf_forward.9} parent=0 // pred_check_branch
    %19 = sbr.rel (0) target = $region13
  $region12: #{ner_classifier_crf_forward.9} parent=0 // pred_region
    _
  $region13: #{ner_classifier_crf_forward.9} parent=0 // pred_fallthru
    _
  // Predicated region
  $region14: #{ner_classifier_crf_forward.9} parent=0 // pred_check
    _
  $region15: #{ner_classifier_crf_forward.9} parent=0 // pred_check_branch
    %21 = sbr.rel (0) target = $region17
  $region16: #{ner_classifier_crf_forward.9} parent=0 // pred_region
    _
  $region17: #{ner_classifier_crf_forward.9} parent=0 // pred_fallthru
    _
  // Predicated region
  $region18: #{ner_classifier_crf_forward.9} parent=0 // pred_check
    _
  $region19: #{ner_classifier_crf_forward.9} parent=0 // pred_check_branch
    %23 = sbr.rel (0) target = $region21
  $region20: #{ner_classifier_crf_forward.9} parent=0 // pred_region
    _
  $region21: #{ner_classifier_crf_forward.9} parent=0 // pred_fallthru
    _
  // Predicated region
  $region22: #{ner_classifier_crf_forward.9} parent=0 // pred_check
    _
  $region23: #{ner_classifier_crf_forward.9} parent=0 // pred_check_branch
    %25 = sbr.rel (0) target = $region25
  $region24: #{ner_classifier_crf_forward.9} parent=0 // pred_region
    _
  $region25: #{ner_classifier_crf_forward.9} parent=0 // pred_fallthru
    _
  // Predicated region
  $region26: #{ner_classifier_crf_forward.9} parent=0 // pred_check
    _
  $region27: #{ner_classifier_crf_forward.9} parent=0 // pred_check_branch
    %27 = sbr.rel (0) target = $region29
  $region28: #{ner_classifier_crf_forward.9} parent=0 // pred_region
    _
  $region29: #{ner_classifier_crf_forward.9} parent=0 // pred_fallthru
    _
  // Predicated region
  $region30: #{ner_classifier_crf_forward.9} parent=0 // pred_check
    _
  $region31: #{ner_classifier_crf_forward.9} parent=0 // pred_check_branch
    %29 = sbr.rel (0) target = $region33
  $region32: #{ner_classifier_crf_forward.9} parent=0 // pred_region
    _
  $region33: #{ner_classifier_crf_forward.9} parent=0 // pred_fallthru
    _
  // Predicated region
  $region34: #{ner_classifier_crf_forward.9} parent=0 // pred_check
    _
  $region35: #{ner_classifier_crf_forward.9} parent=0 // pred_check_branch
    %31 = sbr.rel (0) target = $region37
  $region36: #{ner_classifier_crf_forward.9} parent=0 // pred_region
    _
  $region37: #{ner_classifier_crf_forward.9} parent=0 // pred_fallthru
    _
  %v33 = vld [vmem:[%s0] sm:$0xff]
  %v34 = vld [vmem:[%s0 + $0x8] sm:$0xff]
  %v35 = vpack.c.bf16 %v34, %v33
  %v36 = vld [vmem:[%s1] sm:$0xf]
  %v37 = vld [vmem:[%s1 + $0x4] sm:$0xf]
  %v38 = vld [vmem:[%s1 + $0x8] sm:$0xf]
  %v39 = vld [vmem:[%s1 + $0xc] sm:$0xf]
  %v40 = vld [vmem:[%s1 + $0x10] sm:$0xf]
  %v41 = vld [vmem:[%s1 + $0x14] sm:$0xf]
  %v42 = vld [vmem:[%s1 + $0x18] sm:$0xf]
  %v43 = vld [vmem:[%s1 + $0x1c] sm:$0xf]
  %v44 = vld [vmem:[%s2] sm:$0x1]
  %v46 = vlaneseq
  %v47 = vshrl.u32 %v46, 7
  %v48 = vsub.s32 0, %v47
  %v49 = vrot.slane %v44, %v48
  %v59 = vunpack.c.l.b16 %v36
  %v60 = vunpack.c.l.b16 %v37
  %v61 = vunpack.c.l.b16 %v38
  %v62 = vunpack.c.l.b16 %v39
  %v63 = vunpack.c.l.b16 %v40
  %v64 = vunpack.c.l.b16 %v41
  %v65 = vunpack.c.l.b16 %v42
  %v66 = vunpack.c.l.b16 %v43
  %v67 = vpack.c.b16 %v60, %v59
  %v68 = vpack.c.b16 %v62, %v61
  %v69 = vpack.c.b16 %v64, %v63
  %v70 = vpack.c.b16 %v66, %v65
  %vm75 = vcmask 523264
  %v77 = vsel %vm75, %v35, 0
  %79 = vmatprep.subr.bf16.mxu0 0
  %80 = vmatpush1.bf16.msra.mxu0 0
  %81 = vmatprep.subr.bf16.mxu0 0
  %82 = vmatpush1.bf16.msra.mxu0 0
  %83 = vmatprep.subr.bf16.mxu0 0
  %84 = vmatpush1.bf16.msra.mxu0 0
  %85 = vmatprep.subr.bf16.mxu0 0
  %86 = vmatpush1.bf16.msra.mxu0 0
  %87 = vmatprep.subr.bf16.mxu0 0
  %88 = vmatpush1.bf16.msra.mxu0 %v70
  %89 = vmatprep.subr.bf16.mxu0 0
  %90 = vmatpush1.bf16.msra.mxu0 %v69
  %91 = vmatprep.subr.bf16.mxu0 0
  %92 = vmatpush1.bf16.msra.mxu0 %v68
  %93 = vmatprep.subr.bf16.mxu0 0
  %94 = vmatpush1.bf16.msra.mxu0 %v67
  %95 = vmatprep.subr.bf16.mxu0 0
  %96 = vmatpush2.bf16.msra.mxu0 0
  %97 = vmatprep.subr.bf16.mxu0 0
  %98 = vmatpush2.bf16.msra.mxu0 0
  %99 = vmatprep.subr.bf16.mxu0 0
  %100 = vmatpush2.bf16.msra.mxu0 0
  %101 = vmatprep.subr.bf16.mxu0 0
  %102 = vmatpush2.bf16.msra.mxu0 0
  %103 = vmatprep.subr.bf16.mxu0 0
  %104 = vmatpush2.bf16.msra.mxu0 0
  %105 = vmatprep.subr.bf16.mxu0 0
  %106 = vmatpush2.bf16.msra.mxu0 0
  %107 = vmatprep.subr.bf16.mxu0 0
  %108 = vmatpush2.bf16.msra.mxu0 0
  %109 = vmatprep.subr.bf16.mxu0 0
  %110 = vmatpush2.bf16.msra.mxu0 0
  %111 = vmatprep.mubr.bf16.mxu0 0
  %112 = vmatmul.mubr.bf16.gmra.mxu0 %v77
  %v113 = vpop.f32.mrf.mxu0
  %v114 = vadd.f32 %v49, %v113
  %v115 = vpop.f32.mrf.mxu0
  %v116 = vpop.f32.mrf.mxu0
  %v117 = vadd.f32 %v49, %v116
  %v118 = vpop.f32.mrf.mxu0
  %119 = vdwg.mxu0
  %v120 = vmax.f32 %v114, 0.0
  %v121 = vmax.f32 %v117, 0.0
  %v122 = vpack.c.bf16 %v121, %v120
  %v123 = vld [vmem:[%s3] sm:$0xf]
  %v124 = vld [vmem:[%s3 + $0x4] sm:$0xf]
  %v125 = vld [vmem:[%s3 + $0x8] sm:$0xf]
  %v126 = vld [vmem:[%s3 + $0xc] sm:$0xf]
  %v127 = vld [vmem:[%s3 + $0x10] sm:$0xf]
  %v128 = vld [vmem:[%s3 + $0x14] sm:$0xf]
  %v129 = vld [vmem:[%s3 + $0x18] sm:$0xf]
  %v130 = vld [vmem:[%s3 + $0x1c] sm:$0xf]
  %v131 = vld [vmem:[%s3 + $0x20] sm:$0xf]
  %v132 = vld [vmem:[%s3 + $0x24] sm:$0xf]
  %v133 = vld [vmem:[%s3 + $0x28] sm:$0xf]
  %v134 = vld [vmem:[%s3 + $0x2c] sm:$0xf]
  %v135 = vld [vmem:[%s3 + $0x30] sm:$0xf]
  %v136 = vld [vmem:[%s3 + $0x34] sm:$0xf]
  %v137 = vld [vmem:[%s3 + $0x38] sm:$0xf]
  %v138 = vld [vmem:[%s3 + $0x3c] sm:$0xf]
  %v139 = vld [vmem:[%s4] sm:$0x1]
  %v141 = vlaneseq
  %v142 = vshrl.u32 %v141, 7
  %v143 = vsub.s32 0, %v142
  %v144 = vrot.slane %v139, %v143
  %v162 = vunpack.c.l.b16 %v123
  %v163 = vunpack.c.l.b16 %v124
  %v164 = vunpack.c.l.b16 %v125
  %v165 = vunpack.c.l.b16 %v126
  %v166 = vunpack.c.l.b16 %v127
  %v167 = vunpack.c.l.b16 %v128
  %v168 = vunpack.c.l.b16 %v129
  %v169 = vunpack.c.l.b16 %v130
  %v170 = vunpack.c.l.b16 %v131
  %v171 = vunpack.c.l.b16 %v132
  %v172 = vunpack.c.l.b16 %v133
  %v173 = vunpack.c.l.b16 %v134
  %v174 = vunpack.c.l.b16 %v135
  %v175 = vunpack.c.l.b16 %v136
  %v176 = vunpack.c.l.b16 %v137
  %v177 = vunpack.c.l.b16 %v138
  %v178 = vpack.c.b16 %v163, %v162
  %v179 = vpack.c.b16 %v165, %v164
  %v180 = vpack.c.b16 %v167, %v166
  %v181 = vpack.c.b16 %v169, %v168
  %v182 = vpack.c.b16 %v171, %v170
  %v183 = vpack.c.b16 %v173, %v172
  %v184 = vpack.c.b16 %v175, %v174
  %v185 = vpack.c.b16 %v177, %v176
  %194 = vmatprep.subr.bf16.mxu0 0
  %195 = vmatpush1.bf16.msra.mxu0 %v185
  %196 = vmatprep.subr.bf16.mxu0 0
  %197 = vmatpush1.bf16.msra.mxu0 %v184
  %198 = vmatprep.subr.bf16.mxu0 0
  %199 = vmatpush1.bf16.msra.mxu0 %v183
  %200 = vmatprep.subr.bf16.mxu0 0
  %201 = vmatpush1.bf16.msra.mxu0 %v182
  %202 = vmatprep.subr.bf16.mxu0 0
  %203 = vmatpush1.bf16.msra.mxu0 %v181
  %204 = vmatprep.subr.bf16.mxu0 0
  %205 = vmatpush1.bf16.msra.mxu0 %v180
  %206 = vmatprep.subr.bf16.mxu0 0
  %207 = vmatpush1.bf16.msra.mxu0 %v179
  %208 = vmatprep.subr.bf16.mxu0 0
  %209 = vmatpush1.bf16.msra.mxu0 %v178
  %210 = vmatprep.subr.bf16.mxu0 0
  %211 = vmatpush2.bf16.msra.mxu0 0
  %212 = vmatprep.subr.bf16.mxu0 0
  %213 = vmatpush2.bf16.msra.mxu0 0
  %214 = vmatprep.subr.bf16.mxu0 0
  %215 = vmatpush2.bf16.msra.mxu0 0
  %216 = vmatprep.subr.bf16.mxu0 0
  %217 = vmatpush2.bf16.msra.mxu0 0
  %218 = vmatprep.subr.bf16.mxu0 0
  %219 = vmatpush2.bf16.msra.mxu0 0
  %220 = vmatprep.subr.bf16.mxu0 0
  %221 = vmatpush2.bf16.msra.mxu0 0
  %222 = vmatprep.subr.bf16.mxu0 0
  %223 = vmatpush2.bf16.msra.mxu0 0
  %224 = vmatprep.subr.bf16.mxu0 0
  %225 = vmatpush2.bf16.msra.mxu0 0
  %226 = vmatprep.mubr.bf16.mxu0 0
  %227 = vmatmul.mubr.bf16.gmra.mxu0 %v122
  %v228 = vpop.f32.mrf.mxu0
  %v229 = vadd.f32 %v144, %v228
  %v230 = vpop.f32.mrf.mxu0
  %v231 = vpop.f32.mrf.mxu0
  %v232 = vadd.f32 %v144, %v231
  %v233 = vpop.f32.mrf.mxu0
  %234 = vdwg.mxu0
  %v235 = vmax.f32 %v229, 0.0
  %v236 = vmax.f32 %v232, 0.0
  %v237 = vpack.c.bf16 %v236, %v235
  %v238 = vld [vmem:[%s5] sm:$0xf]
  %v239 = vld [vmem:[%s5 + $0x4] sm:$0xf]
  %v240 = vld [vmem:[%s5 + $0x8] sm:$0xf]
  %v241 = vld [vmem:[%s5 + $0xc] sm:$0xf]
  %v242 = vld [vmem:[%s5 + $0x10] sm:$0xf]
  %v243 = vld [vmem:[%s5 + $0x14] sm:$0xf]
  %v244 = vld [vmem:[%s5 + $0x18] sm:$0xf]
  %v245 = vld [vmem:[%s5 + $0x1c] sm:$0xf]
  %v246 = vld [vmem:[%s5 + $0x20] sm:$0xf]
  %v247 = vld [vmem:[%s5 + $0x24] sm:$0xf]
  %v248 = vld [vmem:[%s5 + $0x28] sm:$0xf]
  %v249 = vld [vmem:[%s5 + $0x2c] sm:$0xf]
  %v250 = vld [vmem:[%s5 + $0x30] sm:$0xf]
  %v251 = vld [vmem:[%s5 + $0x34] sm:$0xf]
  %v252 = vld [vmem:[%s5 + $0x38] sm:$0xf]
  %v253 = vld [vmem:[%s5 + $0x3c] sm:$0xf]
  %v254 = vld [vmem:[%s6] sm:$0x1]
  %v256 = vlaneseq
  %v257 = vshrl.u32 %v256, 7
  %v258 = vsub.s32 0, %v257
  %v259 = vrot.slane %v254, %v258
  %v277 = vunpack.c.l.b16 %v238
  %v278 = vunpack.c.l.b16 %v239
  %v279 = vunpack.c.l.b16 %v240
  %v280 = vunpack.c.l.b16 %v241
  %v281 = vunpack.c.l.b16 %v242
  %v282 = vunpack.c.l.b16 %v243
  %v283 = vunpack.c.l.b16 %v244
  %v284 = vunpack.c.l.b16 %v245
  %v285 = vunpack.c.l.b16 %v246
  %v286 = vunpack.c.l.b16 %v247
  %v287 = vunpack.c.l.b16 %v248
  %v288 = vunpack.c.l.b16 %v249
  %v289 = vunpack.c.l.b16 %v250
  %v290 = vunpack.c.l.b16 %v251
  %v291 = vunpack.c.l.b16 %v252
  %v292 = vunpack.c.l.b16 %v253
  %v293 = vpack.c.b16 %v278, %v277
  %v294 = vpack.c.b16 %v280, %v279
  %v295 = vpack.c.b16 %v282, %v281
  %v296 = vpack.c.b16 %v284, %v283
  %v297 = vpack.c.b16 %v286, %v285
  %v298 = vpack.c.b16 %v288, %v287
  %v299 = vpack.c.b16 %v290, %v289
  %v300 = vpack.c.b16 %v292, %v291
  %309 = vmatprep.subr.bf16.mxu0 0
  %310 = vmatpush1.bf16.msra.mxu0 %v300
  %311 = vmatprep.subr.bf16.mxu0 0
  %312 = vmatpush1.bf16.msra.mxu0 %v299
  %313 = vmatprep.subr.bf16.mxu0 0
  %314 = vmatpush1.bf16.msra.mxu0 %v298
  %315 = vmatprep.subr.bf16.mxu0 0
  %316 = vmatpush1.bf16.msra.mxu0 %v297
  %317 = vmatprep.subr.bf16.mxu0 0
  %318 = vmatpush1.bf16.msra.mxu0 %v296
  %319 = vmatprep.subr.bf16.mxu0 0
  %320 = vmatpush1.bf16.msra.mxu0 %v295
  %321 = vmatprep.subr.bf16.mxu0 0
  %322 = vmatpush1.bf16.msra.mxu0 %v294
  %323 = vmatprep.subr.bf16.mxu0 0
  %324 = vmatpush1.bf16.msra.mxu0 %v293
  %325 = vmatprep.subr.bf16.mxu0 0
  %326 = vmatpush2.bf16.msra.mxu0 0
  %327 = vmatprep.subr.bf16.mxu0 0
  %328 = vmatpush2.bf16.msra.mxu0 0
  %329 = vmatprep.subr.bf16.mxu0 0
  %330 = vmatpush2.bf16.msra.mxu0 0
  %331 = vmatprep.subr.bf16.mxu0 0
  %332 = vmatpush2.bf16.msra.mxu0 0
  %333 = vmatprep.subr.bf16.mxu0 0
  %334 = vmatpush2.bf16.msra.mxu0 0
  %335 = vmatprep.subr.bf16.mxu0 0
  %336 = vmatpush2.bf16.msra.mxu0 0
  %337 = vmatprep.subr.bf16.mxu0 0
  %338 = vmatpush2.bf16.msra.mxu0 0
  %339 = vmatprep.subr.bf16.mxu0 0
  %340 = vmatpush2.bf16.msra.mxu0 0
  %341 = vmatprep.mubr.bf16.mxu0 0
  %342 = vmatmul.mubr.bf16.gmra.mxu0 %v237
  %v343 = vpop.f32.mrf.mxu0
  %v344 = vadd.f32 %v259, %v343
  %v345 = vpop.f32.mrf.mxu0
  %v346 = vpop.f32.mrf.mxu0
  %v347 = vadd.f32 %v259, %v346
  %v348 = vpop.f32.mrf.mxu0
  %349 = vdwg.mxu0
  %v350 = vmax.f32 %v344, 0.0
  %v351 = vmax.f32 %v347, 0.0
  %v352 = vpack.c.bf16 %v351, %v350
  %v353 = vld [vmem:[%s7] sm:$0xf]
  %v354 = vld [vmem:[%s7 + $0x4] sm:$0xf]
  %v355 = vld [vmem:[%s7 + $0x8] sm:$0xf]
  %v356 = vld [vmem:[%s7 + $0xc] sm:$0xf]
  %v357 = vld [vmem:[%s7 + $0x10] sm:$0xf]
  %v358 = vld [vmem:[%s7 + $0x14] sm:$0xf]
  %v359 = vld [vmem:[%s7 + $0x18] sm:$0xf]
  %v360 = vld [vmem:[%s7 + $0x1c] sm:$0xf]
  %v361 = vld [vmem:[%s7 + $0x20] sm:$0xf]
  %v362 = vld [vmem:[%s7 + $0x24] sm:$0xf]
  %v363 = vld [vmem:[%s7 + $0x28] sm:$0xf]
  %v364 = vld [vmem:[%s7 + $0x2c] sm:$0xf]
  %v365 = vld [vmem:[%s7 + $0x30] sm:$0xf]
  %v366 = vld [vmem:[%s7 + $0x34] sm:$0xf]
  %v367 = vld [vmem:[%s7 + $0x38] sm:$0xf]
  %v368 = vld [vmem:[%s7 + $0x3c] sm:$0xf]
  %v369 = vld [vmem:[%s8] sm:$0x1]
  %v371 = vlaneseq
  %v372 = vshrl.u32 %v371, 7
  %v373 = vsub.s32 0, %v372
  %v374 = vrot.slane %v369, %v373
  %v392 = vunpack.c.l.b16 %v353
  %v393 = vunpack.c.l.b16 %v354
  %v394 = vunpack.c.l.b16 %v355
  %v395 = vunpack.c.l.b16 %v356
  %v396 = vunpack.c.l.b16 %v357
  %v397 = vunpack.c.l.b16 %v358
  %v398 = vunpack.c.l.b16 %v359
  %v399 = vunpack.c.l.b16 %v360
  %v400 = vunpack.c.l.b16 %v361
  %v401 = vunpack.c.l.b16 %v362
  %v402 = vunpack.c.l.b16 %v363
  %v403 = vunpack.c.l.b16 %v364
  %v404 = vunpack.c.l.b16 %v365
  %v405 = vunpack.c.l.b16 %v366
  %v406 = vunpack.c.l.b16 %v367
  %v407 = vunpack.c.l.b16 %v368
  %v408 = vpack.c.b16 %v393, %v392
  %v409 = vpack.c.b16 %v395, %v394
  %v410 = vpack.c.b16 %v397, %v396
  %v411 = vpack.c.b16 %v399, %v398
  %v412 = vpack.c.b16 %v401, %v400
  %v413 = vpack.c.b16 %v403, %v402
  %v414 = vpack.c.b16 %v405, %v404
  %v415 = vpack.c.b16 %v407, %v406
  %424 = vmatprep.subr.bf16.mxu0 0
  %425 = vmatpush1.bf16.msra.mxu0 %v415
  %426 = vmatprep.subr.bf16.mxu0 0
  %427 = vmatpush1.bf16.msra.mxu0 %v414
  %428 = vmatprep.subr.bf16.mxu0 0
  %429 = vmatpush1.bf16.msra.mxu0 %v413
  %430 = vmatprep.subr.bf16.mxu0 0
  %431 = vmatpush1.bf16.msra.mxu0 %v412
  %432 = vmatprep.subr.bf16.mxu0 0
  %433 = vmatpush1.bf16.msra.mxu0 %v411
  %434 = vmatprep.subr.bf16.mxu0 0
  %435 = vmatpush1.bf16.msra.mxu0 %v410
  %436 = vmatprep.subr.bf16.mxu0 0
  %437 = vmatpush1.bf16.msra.mxu0 %v409
  %438 = vmatprep.subr.bf16.mxu0 0
  %439 = vmatpush1.bf16.msra.mxu0 %v408
  %440 = vmatprep.subr.bf16.mxu0 0
  %441 = vmatpush2.bf16.msra.mxu0 0
  %442 = vmatprep.subr.bf16.mxu0 0
  %443 = vmatpush2.bf16.msra.mxu0 0
  %444 = vmatprep.subr.bf16.mxu0 0
  %445 = vmatpush2.bf16.msra.mxu0 0
  %446 = vmatprep.subr.bf16.mxu0 0
  %447 = vmatpush2.bf16.msra.mxu0 0
  %448 = vmatprep.subr.bf16.mxu0 0
  %449 = vmatpush2.bf16.msra.mxu0 0
  %450 = vmatprep.subr.bf16.mxu0 0
  %451 = vmatpush2.bf16.msra.mxu0 0
  %452 = vmatprep.subr.bf16.mxu0 0
  %453 = vmatpush2.bf16.msra.mxu0 0
  %454 = vmatprep.subr.bf16.mxu0 0
  %455 = vmatpush2.bf16.msra.mxu0 0
  %456 = vmatprep.mubr.bf16.mxu0 0
  %457 = vmatmul.mubr.bf16.gmra.mxu0 %v352
  %v458 = vpop.f32.mrf.mxu0
  %v459 = vadd.f32 %v374, %v458
  %v460 = vpop.f32.mrf.mxu0
  %v461 = vpop.f32.mrf.mxu0
  %v462 = vadd.f32 %v374, %v461
  %v463 = vpop.f32.mrf.mxu0
  %464 = vdwg.mxu0
  %465 = vmax.xlane.f32.xlu0 %v459
  %v466 = vpop.xlane.xlu0 %465
  %467 = vmax.xlane.f32.xlu0 %v462
  %v468 = vpop.xlane.xlu0 %467
  %v469 = vsub.f32 %v459, %v466
  %v470 = vsub.f32 %v462, %v468
  %v471 = vmul.f32 %v469, 1.442695
  %v472 = vpow.pop %v471
  %v473 = vmul.f32 %v470, 1.442695
  %v474 = vpow.pop %v473
  %475 = vadd.xlane.f32.xlu0 %v472
  %v476 = vpop.xlane.xlu0 %475
  %477 = vadd.xlane.f32.xlu0 %v474
  %v478 = vpop.xlane.xlu0 %477
  %v479 = vlog2.pop %v476
  %v480 = vmul.f32 %v479, 0.6931472
  %v481 = vlog2.pop %v478
  %v482 = vmul.f32 %v481, 0.6931472
  %v483 = vsub.f32 %v469, %v480
  %v484 = vsub.f32 %v470, %v482
  %485 = vst [vmem:[%s9] sm:$0xff] %v483
  %486 = vst [vmem:[%s9 + $0x8] sm:$0xff] %v484
  // Predicated region
  $region38: #{ner_classifier_crf_forward.9} parent=0 // pred_check
    _
  $region39: #{ner_classifier_crf_forward.9} parent=0 // pred_check_branch
    %488 = sbr.rel (0) target = $region41
  $region40: #{ner_classifier_crf_forward.9} parent=0 // pred_region
    _
  $region41: #{ner_classifier_crf_forward.9} parent=0 // pred_fallthru
    _
  // Predicated region
  $region42: #{ner_classifier_crf_forward.9} parent=0 // pred_check
    _
  $region43: #{ner_classifier_crf_forward.9} parent=0 // pred_check_branch
    %490 = sbr.rel (0) target = $region45
  $region44: #{ner_classifier_crf_forward.9} parent=0 // pred_region
    _
  $region45: #{ner_classifier_crf_forward.9} parent=0 // pred_fallthru
    _

</llo_original>
